<compile_context>
chip_gen: v7x
topology: tpu7x:2x2x1
jax: 0.10.0
libtpu: 0.0.40
codegen_flags: <defaults>
</compile_context>

<pallas_src>
import jax
import jax.numpy as jnp
from jax.experimental import pallas as pl
from jax.experimental.pallas import tpu as pltpu


def _round_up(n, m):
    return ((n + m - 1) // m) * m


def _batch_tiling(B):
    """Pick (tile_rows, padded_rows).

    Tiles are 16-row aligned (bf16 packs sublanes in pairs) and capped near
    512 rows so the ~0.35 us per-grid-step overhead is amortized without
    inflating VMEM.  For B > 16 the grid always has >= 2 steps so the
    'parallel' batch axis can shard across v7x's two TensorCores.
    """
    B = max(int(B), 1)
    if B <= 16:
        tb = _round_up(B, 16)
        return tb, tb
    steps = max(2, -(-B // 512))            # cdiv(B, 512), at least 2
    tb = _round_up(-(-B // steps), 16)      # cdiv(B, steps), 16-aligned
    return tb, tb * steps


def _generator_kernel(x_ref, oh_ref, w1a_ref, w1b_ref, b1_ref,
                      w2_ref, b2_ref, w3_ref, b3_ref, o_ref):
    # Layer 1: Linear(input_size+10, 256) + ReLU.
    # cat([x, onehot]) @ W1 == x @ W1a + onehot @ W1b  (split weight, no concat).
    h = (jnp.dot(x_ref[...], w1a_ref[...], preferred_element_type=jnp.float32)
         + jnp.dot(oh_ref[...], w1b_ref[...], preferred_element_type=jnp.float32)
         + b1_ref[...])
    h = jnp.maximum(h, 0.0)                      # f32 elementwise (v5e-safe)

    # Layer 2: Linear(256, 256) + ReLU.
    h = jnp.dot(h.astype(jnp.bfloat16), w2_ref[...],
                preferred_element_type=jnp.float32) + b2_ref[...]
    h = jnp.maximum(h, 0.0)

    # Layer 3: Linear(256, 784->896 padded) + Tanh.
    # tanh kept in f32 (v5e EUP has no bf16 path); store is bf16.
    h = jnp.dot(h.astype(jnp.bfloat16), w3_ref[...],
                preferred_element_type=jnp.float32) + b3_ref[...]
    o_ref[...] = jnp.tanh(h).astype(o_ref.dtype)


def init_params(key, input_size):
    """PyTorch-equivalent f32 parameters (weights stored as (in, out))."""
    dims = [(input_size + 10, 256), (256, 256), (256, 784)]
    params = []
    for i, (din, dout) in enumerate(dims):
        kw, kb = jax.random.split(jax.random.fold_in(key, i))
        bound = 1.0 / jnp.sqrt(din)
        w = jax.random.uniform(kw, (din, dout), jnp.float32, -bound, bound)
        b = jax.random.uniform(kb, (1, dout), jnp.float32, -bound, bound)
        params += [w, b]
    return tuple(params)


def prepare_params(params, input_size):
    """One-time conversion: split W1, bf16-cast weights, pad out dim to 128x."""
    w1, b1, w2, b2, w3, b3 = params
    out_dim = w3.shape[1]                          # 784
    pad = (-out_dim) % 128                         # -> 896 total
    w1a = w1[:input_size].astype(jnp.bfloat16)     # (input_size, 256)
    w1b = w1[input_size:].astype(jnp.bfloat16)     # (10, 256)
    w3p = jnp.pad(w3, ((0, 0), (0, pad))).astype(jnp.bfloat16)
    b3p = jnp.pad(b3, ((0, 0), (0, pad)))          # bias stays f32
    return (w1a, w1b, b1, w2.astype(jnp.bfloat16), b2, w3p, b3p, out_dim)


def generator_forward(x, onehot, prepared):
    """x: (B, input_size) f32, onehot: (B, 10) f32.

    Returns the PADDED bf16 output of shape (B_pad, 896); the valid region is
    [:B, :784].  Rows B..B_pad-1 and columns 784..895 are padding — consume or
    slice them away inside your own jit so XLA fuses the slice (avoids an
    extra full-output HBM copy here).
    """
    w1a, w1b, b1, w2, b2, w3, b3, _ = prepared
    B = x.shape[0]
    out_pad = w3.shape[1]                          # 896

    TB, B_pad = _batch_tiling(B)

    x_p = jnp.pad(x, ((0, B_pad - B), (0, 0))).astype(jnp.bfloat16)
    oh_p = jnp.pad(onehot, ((0, B_pad - B), (0, 0))).astype(jnp.bfloat16)

    resident = lambda a: pl.BlockSpec(a.shape, lambda i: (0, 0))

    out = pl.pallas_call(
        _generator_kernel,
        out_shape=jax.ShapeDtypeStruct((B_pad, out_pad), jnp.bfloat16),
        grid=(B_pad // TB,),
        in_specs=[
            pl.BlockSpec((TB, x_p.shape[1]), lambda i: (i, 0)),
            pl.BlockSpec((TB, oh_p.shape[1]), lambda i: (i, 0)),
            resident(w1a), resident(w1b), resident(b1),
            resident(w2), resident(b2),
            resident(w3), resident(b3),
        ],
        out_specs=pl.BlockSpec((TB, out_pad), lambda i: (i, 0)),
        compiler_params=pltpu.CompilerParams(
            dimension_semantics=("parallel",)),
    )(x_p, oh_p, w1a, w1b, b1, w2, b2, w3, b3)

    return out


def reference_forward(x, onehot, params):
    """Pure-JAX f32 reference matching the PyTorch module."""
    w1, b1, w2, b2, w3, b3 = params
    h = jnp.concatenate([x, onehot], axis=-1)
    h = jnp.maximum(h @ w1 + b1, 0.0)
    h = jnp.maximum(h @ w2 + b2, 0.0)
    return jnp.tanh(h @ w3 + b3)


if __name__ == "__main__":
    key = jax.random.PRNGKey(0)
    batch, input_size = 24, 32          # batch > 16 -> exercises the 2-step grid

    kx, kc, kp = jax.random.split(key, 3)
    x = jax.random.normal(kx, (batch, input_size), jnp.float32)
    labels = jax.random.randint(kc, (batch,), 0, 10)
    onehot = jax.nn.one_hot(labels, 10, dtype=jnp.float32)

    params = init_params(kp, input_size)
    prepared = prepare_params(params, input_size)
    out_dim = prepared[-1]

    out_padded = generator_forward(x, onehot, prepared)
    out_padded = jax.block_until_ready(out_padded)

    # Slice away the padding only for the correctness check (in real use the
    # padded block is consumed / sliced inside the caller's jit).
    out = out_padded[:batch, :out_dim].astype(jnp.float32)

    ref = reference_forward(x, onehot, params)
    assert out.shape == (batch, 784), out.shape
    # bf16 matmul operands + bf16 output store vs f32 reference.
    assert jnp.max(jnp.abs(out - ref)) < 4e-2, "mismatch vs f32 reference"

    print("KERNEL_OK")
</pallas_src>

<mosaic_0001>
module attributes {stable_mosaic.version = 11 : i64} {
  func.func @_generator_kernel(%arg0: i32, %arg1: memref<16x32xbf16, #tpu.memory_space<vmem>>, %arg2: memref<16x10xbf16, #tpu.memory_space<vmem>>, %arg3: memref<32x256xbf16, #tpu.memory_space<vmem>>, %arg4: memref<10x256xbf16, #tpu.memory_space<vmem>>, %arg5: memref<1x256xf32, #tpu.memory_space<vmem>>, %arg6: memref<256x256xbf16, #tpu.memory_space<vmem>>, %arg7: memref<1x256xf32, #tpu.memory_space<vmem>>, %arg8: memref<256x896xbf16, #tpu.memory_space<vmem>>, %arg9: memref<1x896xf32, #tpu.memory_space<vmem>>, %arg10: memref<16x896xbf16, #tpu.memory_space<vmem>>) attributes {dimension_semantics = [#tpu.dimension_semantics<parallel>], iteration_bounds = array<i64: 2>, scalar_prefetch = 0 : i64, scratch_operands = 0 : i64, tpu.core_type = #tpu.core_type<tc>, window_params = [{transform_indices = @transform_0, window_bounds = array<i64: 16, 32>}, {transform_indices = @transform_1, window_bounds = array<i64: 16, 10>}, {pipeline_mode = #tpu.pipeline_mode<synchronous>, transform_indices = @transform_2, window_bounds = array<i64: 32, 256>}, {pipeline_mode = #tpu.pipeline_mode<synchronous>, transform_indices = @transform_3, window_bounds = array<i64: 10, 256>}, {pipeline_mode = #tpu.pipeline_mode<synchronous>, transform_indices = @transform_4, window_bounds = array<i64: 1, 256>}, {pipeline_mode = #tpu.pipeline_mode<synchronous>, transform_indices = @transform_5, window_bounds = array<i64: 256, 256>}, {pipeline_mode = #tpu.pipeline_mode<synchronous>, transform_indices = @transform_6, window_bounds = array<i64: 1, 256>}, {pipeline_mode = #tpu.pipeline_mode<synchronous>, transform_indices = @transform_7, window_bounds = array<i64: 256, 896>}, {pipeline_mode = #tpu.pipeline_mode<synchronous>, transform_indices = @transform_8, window_bounds = array<i64: 1, 896>}, {transform_indices = @transform_9, window_bounds = array<i64: 16, 896>}]} {
    %c0 = arith.constant 0 : index
    %c0_0 = arith.constant 0 : index
    %0 = vector.load %arg1[%c0, %c0_0] : memref<16x32xbf16, #tpu.memory_space<vmem>>, vector<16x32xbf16>
    %c0_1 = arith.constant 0 : index
    %c0_2 = arith.constant 0 : index
    %1 = vector.load %arg3[%c0_1, %c0_2] : memref<32x256xbf16, #tpu.memory_space<vmem>>, vector<32x256xbf16>
    %cst = arith.constant dense<0.000000e+00> : vector<16x256xf32>
    %2 = tpu.matmul %0, %1, %cst {dimension_numbers = #tpu.dot_dimension_numbers<[1], [0], [0], [1], [0, 0, 1, 1], [], []>} : vector<16x32xbf16>, vector<32x256xbf16>, vector<16x256xf32> -> vector<16x256xf32>
    %c0_3 = arith.constant 0 : index
    %c0_4 = arith.constant 0 : index
    %3 = vector.load %arg2[%c0_3, %c0_4] : memref<16x10xbf16, #tpu.memory_space<vmem>>, vector<16x10xbf16>
    %c0_5 = arith.constant 0 : index
    %c0_6 = arith.constant 0 : index
    %4 = vector.load %arg4[%c0_5, %c0_6] : memref<10x256xbf16, #tpu.memory_space<vmem>>, vector<10x256xbf16>
    %cst_7 = arith.constant dense<0.000000e+00> : vector<16x256xf32>
    %5 = tpu.matmul %3, %4, %cst_7 {dimension_numbers = #tpu.dot_dimension_numbers<[1], [0], [0], [1], [0, 0, 1, 1], [], []>} : vector<16x10xbf16>, vector<10x256xbf16>, vector<16x256xf32> -> vector<16x256xf32>
    %6 = arith.addf %2, %5 : vector<16x256xf32>
    %c0_8 = arith.constant 0 : index
    %c0_9 = arith.constant 0 : index
    %7 = vector.load %arg5[%c0_8, %c0_9] : memref<1x256xf32, #tpu.memory_space<vmem>>, vector<1x256xf32>
    %8 = vector.broadcast %7 : vector<1x256xf32> to vector<16x256xf32>
    %9 = arith.addf %6, %8 : vector<16x256xf32>
    %cst_10 = arith.constant 0.000000e+00 : f32
    %10 = vector.broadcast %cst_10 : f32 to vector<16x256xf32>
    %11 = arith.maximumf %9, %10 : vector<16x256xf32>
    %12 = arith.truncf %11 : vector<16x256xf32> to vector<16x256xbf16>
    %c0_11 = arith.constant 0 : index
    %c0_12 = arith.constant 0 : index
    %13 = vector.load %arg6[%c0_11, %c0_12] : memref<256x256xbf16, #tpu.memory_space<vmem>>, vector<256x256xbf16>
    %cst_13 = arith.constant dense<0.000000e+00> : vector<16x256xf32>
    %14 = tpu.matmul %12, %13, %cst_13 {dimension_numbers = #tpu.dot_dimension_numbers<[1], [0], [0], [1], [0, 0, 1, 1], [], []>} : vector<16x256xbf16>, vector<256x256xbf16>, vector<16x256xf32> -> vector<16x256xf32>
    %c0_14 = arith.constant 0 : index
    %c0_15 = arith.constant 0 : index
    %15 = vector.load %arg7[%c0_14, %c0_15] : memref<1x256xf32, #tpu.memory_space<vmem>>, vector<1x256xf32>
    %16 = vector.broadcast %15 : vector<1x256xf32> to vector<16x256xf32>
    %17 = arith.addf %14, %16 : vector<16x256xf32>
    %cst_16 = arith.constant 0.000000e+00 : f32
    %18 = vector.broadcast %cst_16 : f32 to vector<16x256xf32>
    %19 = arith.maximumf %17, %18 : vector<16x256xf32>
    %20 = arith.truncf %19 : vector<16x256xf32> to vector<16x256xbf16>
    %c0_17 = arith.constant 0 : index
    %c0_18 = arith.constant 0 : index
    %21 = vector.load %arg8[%c0_17, %c0_18] : memref<256x896xbf16, #tpu.memory_space<vmem>>, vector<256x896xbf16>
    %cst_19 = arith.constant dense<0.000000e+00> : vector<16x896xf32>
    %22 = tpu.matmul %20, %21, %cst_19 {dimension_numbers = #tpu.dot_dimension_numbers<[1], [0], [0], [1], [0, 0, 1, 1], [], []>} : vector<16x256xbf16>, vector<256x896xbf16>, vector<16x896xf32> -> vector<16x896xf32>
    %c0_20 = arith.constant 0 : index
    %c0_21 = arith.constant 0 : index
    %23 = vector.load %arg9[%c0_20, %c0_21] : memref<1x896xf32, #tpu.memory_space<vmem>>, vector<1x896xf32>
    %24 = vector.broadcast %23 : vector<1x896xf32> to vector<16x896xf32>
    %25 = arith.addf %22, %24 : vector<16x896xf32>
    %26 = math.tanh %25 : vector<16x896xf32>
    %27 = arith.truncf %26 : vector<16x896xf32> to vector<16x896xbf16>
    %c0_22 = arith.constant 0 : index
    %c0_23 = arith.constant 0 : index
    %28 = vector.load %arg10[%c0_22, %c0_23] : memref<16x896xbf16, #tpu.memory_space<vmem>>, vector<16x896xbf16>
    tpu.vector_store %arg10[%c0_22, %c0_23], %27 {strides = array<i32>} : memref<16x896xbf16, #tpu.memory_space<vmem>>, vector<16x896xbf16>,
    return
  }
  func.func @transform_0(%arg0: i32) -> (i32, i32) {
    %c0_i32 = arith.constant 0 : i32
    %c0_i32_0 = arith.constant 0 : i32
    return %arg0, %c0_i32 : i32, i32
  }
  func.func @transform_1(%arg0: i32) -> (i32, i32) {
    %c0_i32 = arith.constant 0 : i32
    %c0_i32_0 = arith.constant 0 : i32
    return %arg0, %c0_i32 : i32, i32
  }
  func.func @transform_2(%arg0: i32) -> (i32, i32) {
    %c0_i32 = arith.constant 0 : i32
    %c0_i32_0 = arith.constant 0 : i32
    %c0_i32_1 = arith.constant 0 : i32
    return %c0_i32, %c0_i32_0 : i32, i32
  }
  func.func @transform_3(%arg0: i32) -> (i32, i32) {
    %c0_i32 = arith.constant 0 : i32
    %c0_i32_0 = arith.constant 0 : i32
    %c0_i32_1 = arith.constant 0 : i32
    return %c0_i32, %c0_i32_0 : i32, i32
  }
  func.func @transform_4(%arg0: i32) -> (i32, i32) {
    %c0_i32 = arith.constant 0 : i32
    %c0_i32_0 = arith.constant 0 : i32
    %c0_i32_1 = arith.constant 0 : i32
    return %c0_i32, %c0_i32_0 : i32, i32
  }
  func.func @transform_5(%arg0: i32) -> (i32, i32) {
    %c0_i32 = arith.constant 0 : i32
    %c0_i32_0 = arith.constant 0 : i32
    %c0_i32_1 = arith.constant 0 : i32
    return %c0_i32, %c0_i32_0 : i32, i32
  }
  func.func @transform_6(%arg0: i32) -> (i32, i32) {
    %c0_i32 = arith.constant 0 : i32
    %c0_i32_0 = arith.constant 0 : i32
    %c0_i32_1 = arith.constant 0 : i32
    return %c0_i32, %c0_i32_0 : i32, i32
  }
  func.func @transform_7(%arg0: i32) -> (i32, i32) {
    %c0_i32 = arith.constant 0 : i32
    %c0_i32_0 = arith.constant 0 : i32
    %c0_i32_1 = arith.constant 0 : i32
    return %c0_i32, %c0_i32_0 : i32, i32
  }
  func.func @transform_8(%arg0: i32) -> (i32, i32) {
    %c0_i32 = arith.constant 0 : i32
    %c0_i32_0 = arith.constant 0 : i32
    %c0_i32_1 = arith.constant 0 : i32
    return %c0_i32, %c0_i32_0 : i32, i32
  }
  func.func @transform_9(%arg0: i32) -> (i32, i32) {
    %c0_i32 = arith.constant 0 : i32
    %c0_i32_0 = arith.constant 0 : i32
    return %arg0, %c0_i32 : i32, i32
  }
}

</mosaic_0001>

<llo_original>
// kernel: tpu_custom_call.1
$region0: #{tpu_custom_call.1}
  #allocation0 [shape = 'u32[]', space=smem, size = 0x4, offset = 0x4, fixed_abs, tag = 'smem constant byte address 0x4 - core index']
  #allocation1 [shape = 'u32[144,128]{1,0:T(1,128)}', space=vmem, size = 0x12000, scoped, tag = 'internal scratch']
  %s0 = inlined_call_operand.vmem [shape: bf16[32,32], index: 0, kind: input, shape index: {}]
  %s1 = inlined_call_operand.vmem [shape: bf16[32,10], index: 1, kind: input, shape index: {}]
  %s2 = inlined_call_operand.hbm [shape: bf16[32,256], index: 2, kind: input, shape index: {}]
  %s3 = inlined_call_operand.vmem [shape: bf16[10,256], index: 3, kind: input, shape index: {}]
  %s4 = inlined_call_operand.hbm [shape: f32[1,256], index: 4, kind: input, shape index: {}]
  %s5 = inlined_call_operand.hbm [shape: bf16[256,256], index: 5, kind: input, shape index: {}]
  %s6 = inlined_call_operand.vmem [shape: f32[1,256], index: 6, kind: input, shape index: {}]
  %s7 = inlined_call_operand.hbm [shape: bf16[256,896], index: 7, kind: input, shape index: {}]
  %s8 = inlined_call_operand.vmem [shape: f32[1,896], index: 8, kind: input, shape index: {}]
  %s9 = inlined_call_operand.hbm [shape: bf16[32,896], index: 9, kind: output, shape index: {}]
  %s10 = sld [smem:[#allocation0]]
  $region85: #{tpu_custom_call.1} parent=0
    _
  %s12 = ssub.s32 1, %s10
  %s13 = scalar_select 0, %s12, %s10
  $region1: #{tpu_custom_call.1} parent=0
    #allocation2 [shape = 'u8[16384]{0}', space=vmem, size = 0x4000, scoped, tag = 'input window, operand 2, single buffered']
    #allocation3 [shape = 's32[2]{0}', space=sflag, size = 0x8, scoped, tag = 'scoped memory for tpu_custom_call.1']
    #allocation4 [shape = 's32[2]{0}', space=sflag, size = 0x8, scoped, tag = 'scoped memory for tpu_custom_call.1']
    #allocation5 [shape = 'u8[1024]{0}', space=vmem, size = 0x400, scoped, tag = 'input window, operand 4, single buffered']
    #allocation6 [shape = 's32[1]{0}', space=sflag, size = 0x4, scoped, tag = 'scoped memory for tpu_custom_call.1']
    #allocation7 [shape = 'u8[131072]{0}', space=vmem, size = 0x20000, scoped, tag = 'input window, operand 5, single buffered']
    #allocation8 [shape = 'u8[458752]{0}', space=vmem, size = 0x70000, scoped, tag = 'input window, operand 7, single buffered']
    #allocation9 [shape = 's32[1]{0}', space=sflag, size = 0x4, scoped, tag = 'scoped memory for tpu_custom_call.1']
    #allocation10 [shape = 'u8[57344]{0}', space=vmem, size = 0xe000, scoped, tag = 'output window, operand 0']
    %14 = vsyncpa [#allocation3], 0
    %15 = vsyncpa [#allocation6], 0
    %16 = vsyncpa [#allocation9], 0
    %17 = vsyncpa [#allocation4], 0
    %s18 = scalar_lea.sflag [#allocation4], 1
    %19 = vsyncpa %s18, 0
    loop: start=0, step=1, limit=4
    $region2: #{tpu_custom_call.1} parent=1 // loop_pre_header
      _
    $region3: #{tpu_custom_call.1} parent=1 // loop_header
      %s21 = sphi 0, %s25
      %p22 = scmp.ge.s32.totalorder %s21, 4
      %s31 = sphi 0, %s33
      %s34 = sphi 0, %s31
      %s35 = sphi 0, %s34
      %s51 = sphi 0, %s35
      %s57 = sphi 0, %s59
      %s60 = sphi 0, %s57
      %s61 = sphi 0, %s60
      %s77 = sphi 0, %s61
      %s81 = sphi 0, %s81
      %s83 = sphi 0, %s81
      %s84 = sphi 0, %s83
      %s98 = sphi 0, %s84
      %s102 = sphi 0, %s102
      %s104 = sphi 0, %s102
      %s105 = sphi 0, %s104
      %s119 = sphi 0, %s105
      %s123 = sphi 0, %s123
      %s125 = sphi 0, %s123
      %s126 = sphi 0, %s125
      %s140 = sphi 0, %s126
      %s144 = sphi 0, %s144
      %s146 = sphi 0, %s144
      %s147 = sphi 0, %s146
      %s161 = sphi 0, %s147
      %s165 = sphi 0, %s165
      %s167 = sphi 0, %s165
      %s168 = sphi 0, %s167
      %s182 = sphi 0, %s168
      %s186 = sphi 0, %s186
      %s188 = sphi 0, %s186
      %s189 = sphi 0, %s188
      %s203 = sphi 0, %s189
      %s207 = sphi 0, %s207
      %s209 = sphi 0, %s207
      %s210 = sphi 0, %s209
      %s224 = sphi 0, %s210
      %s230 = sphi 0, %s232
      %s233 = sphi 0, %s230
      %s234 = sphi 0, %s233
      %s250 = sphi 0, %s234
    $region4: #{tpu_custom_call.1} parent=1 // loop_header_branch
      %24 = sbr.rel (%p22) target = $region8
    $region5: #{tpu_custom_call.1} parent=1 // loop_body
      %s26 = ssub.s32 %s21, 1
      %s27 = ssub.s32 %s21, 2
      %s28 = sadd.s32 %s21, 1
      %s29 = ssub.s32 %s21, %s28
      %p30 = scmp.eq.s32.totalorder %s29, 0
      %s32 = sadd.s32 %s31, 1
      %s33 = scalar_select %p30, %s31, %s32
      %p36 = pneg %p30
      %p37 = scmp.eq.s32.totalorder %s21, 1
      %p38 = por %p36, %p37
      %p39 = scmp.ne.s32.totalorder %s31, %s34
      %p40 = scmp.eq.s32.totalorder %s21, 0
      %p41 = por %p39, %p40
      %p42 = scmp.ne.s32.totalorder %s31, %s34
      %p43 = scmp.eq.s32.totalorder %s26, 1
      %p44 = por %p42, %p43
      %p45 = scmp.ne.s32.totalorder %s34, %s35
      %p46 = scmp.eq.s32.totalorder %s26, 0
      %p47 = por %p45, %p46
      %p48 = scmp.ne.s32.totalorder %s34, %s35
      %p49 = scmp.eq.s32.totalorder %s27, 1
      %p50 = por %p48, %p49
      %p52 = scmp.ne.s32.totalorder %s35, %s51
      %p53 = scmp.eq.s32.totalorder %s27, 0
      %p54 = por %p52, %p53
      %s55 = ssub.s32 %s21, %s28
      %p56 = scmp.eq.s32.totalorder %s55, 0
      %s58 = sadd.s32 %s57, 1
      %s59 = scalar_select %p56, %s57, %s58
      %p62 = pneg %p56
      %p63 = scmp.eq.s32.totalorder %s21, 1
      %p64 = por %p62, %p63
      %p65 = scmp.ne.s32.totalorder %s57, %s60
      %p66 = scmp.eq.s32.totalorder %s21, 0
      %p67 = por %p65, %p66
      %p68 = scmp.ne.s32.totalorder %s57, %s60
      %p69 = scmp.eq.s32.totalorder %s26, 1
      %p70 = por %p68, %p69
      %p71 = scmp.ne.s32.totalorder %s60, %s61
      %p72 = scmp.eq.s32.totalorder %s26, 0
      %p73 = por %p71, %p72
      %p74 = scmp.ne.s32.totalorder %s60, %s61
      %p75 = scmp.eq.s32.totalorder %s27, 1
      %p76 = por %p74, %p75
      %p78 = scmp.ne.s32.totalorder %s61, %s77
      %p79 = scmp.eq.s32.totalorder %s27, 0
      %p80 = por %p78, %p79
      %s82 = sadd.s32 %s81, 1
      %p85 = scmp.eq.s32.totalorder %s21, 1
      %p86 = scmp.ne.s32.totalorder %s81, %s83
      %p87 = scmp.eq.s32.totalorder %s21, 0
      %p88 = por %p86, %p87
      %p89 = scmp.ne.s32.totalorder %s81, %s83
      %p90 = scmp.eq.s32.totalorder %s26, 1
      %p91 = por %p89, %p90
      %p92 = scmp.ne.s32.totalorder %s83, %s84
      %p93 = scmp.eq.s32.totalorder %s26, 0
      %p94 = por %p92, %p93
      %p95 = scmp.ne.s32.totalorder %s83, %s84
      %p96 = scmp.eq.s32.totalorder %s27, 1
      %p97 = por %p95, %p96
      %p99 = scmp.ne.s32.totalorder %s84, %s98
      %p100 = scmp.eq.s32.totalorder %s27, 0
      %p101 = por %p99, %p100
      %s103 = sadd.s32 %s102, 1
      %p106 = scmp.eq.s32.totalorder %s21, 1
      %p107 = scmp.ne.s32.totalorder %s102, %s104
      %p108 = scmp.eq.s32.totalorder %s21, 0
      %p109 = por %p107, %p108
      %p110 = scmp.ne.s32.totalorder %s102, %s104
      %p111 = scmp.eq.s32.totalorder %s26, 1
      %p112 = por %p110, %p111
      %p113 = scmp.ne.s32.totalorder %s104, %s105
      %p114 = scmp.eq.s32.totalorder %s26, 0
      %p115 = por %p113, %p114
      %p116 = scmp.ne.s32.totalorder %s104, %s105
      %p117 = scmp.eq.s32.totalorder %s27, 1
      %p118 = por %p116, %p117
      %p120 = scmp.ne.s32.totalorder %s105, %s119
      %p121 = scmp.eq.s32.totalorder %s27, 0
      %p122 = por %p120, %p121
      %s124 = sadd.s32 %s123, 1
      %p127 = scmp.eq.s32.totalorder %s21, 1
      %p128 = scmp.ne.s32.totalorder %s123, %s125
      %p129 = scmp.eq.s32.totalorder %s21, 0
      %p130 = por %p128, %p129
      %p131 = scmp.ne.s32.totalorder %s123, %s125
      %p132 = scmp.eq.s32.totalorder %s26, 1
      %p133 = por %p131, %p132
      %p134 = scmp.ne.s32.totalorder %s125, %s126
      %p135 = scmp.eq.s32.totalorder %s26, 0
      %p136 = por %p134, %p135
      %p137 = scmp.ne.s32.totalorder %s125, %s126
      %p138 = scmp.eq.s32.totalorder %s27, 1
      %p139 = por %p137, %p138
      %p141 = scmp.ne.s32.totalorder %s126, %s140
      %p142 = scmp.eq.s32.totalorder %s27, 0
      %p143 = por %p141, %p142
      %s145 = sadd.s32 %s144, 1
      %p148 = scmp.eq.s32.totalorder %s21, 1
      %p149 = scmp.ne.s32.totalorder %s144, %s146
      %p150 = scmp.eq.s32.totalorder %s21, 0
      %p151 = por %p149, %p150
      %p152 = scmp.ne.s32.totalorder %s144, %s146
      %p153 = scmp.eq.s32.totalorder %s26, 1
      %p154 = por %p152, %p153
      %p155 = scmp.ne.s32.totalorder %s146, %s147
      %p156 = scmp.eq.s32.totalorder %s26, 0
      %p157 = por %p155, %p156
      %p158 = scmp.ne.s32.totalorder %s146, %s147
      %p159 = scmp.eq.s32.totalorder %s27, 1
      %p160 = por %p158, %p159
      %p162 = scmp.ne.s32.totalorder %s147, %s161
      %p163 = scmp.eq.s32.totalorder %s27, 0
      %p164 = por %p162, %p163
      %s166 = sadd.s32 %s165, 1
      %p169 = scmp.eq.s32.totalorder %s21, 1
      %p170 = scmp.ne.s32.totalorder %s165, %s167
      %p171 = scmp.eq.s32.totalorder %s21, 0
      %p172 = por %p170, %p171
      %p173 = scmp.ne.s32.totalorder %s165, %s167
      %p174 = scmp.eq.s32.totalorder %s26, 1
      %p175 = por %p173, %p174
      %p176 = scmp.ne.s32.totalorder %s167, %s168
      %p177 = scmp.eq.s32.totalorder %s26, 0
      %p178 = por %p176, %p177
      %p179 = scmp.ne.s32.totalorder %s167, %s168
      %p180 = scmp.eq.s32.totalorder %s27, 1
      %p181 = por %p179, %p180
      %p183 = scmp.ne.s32.totalorder %s168, %s182
      %p184 = scmp.eq.s32.totalorder %s27, 0
      %p185 = por %p183, %p184
      %s187 = sadd.s32 %s186, 1
      %p190 = scmp.eq.s32.totalorder %s21, 1
      %p191 = scmp.ne.s32.totalorder %s186, %s188
      %p192 = scmp.eq.s32.totalorder %s21, 0
      %p193 = por %p191, %p192
      %p194 = scmp.ne.s32.totalorder %s186, %s188
      %p195 = scmp.eq.s32.totalorder %s26, 1
      %p196 = por %p194, %p195
      %p197 = scmp.ne.s32.totalorder %s188, %s189
      %p198 = scmp.eq.s32.totalorder %s26, 0
      %p199 = por %p197, %p198
      %p200 = scmp.ne.s32.totalorder %s188, %s189
      %p201 = scmp.eq.s32.totalorder %s27, 1
      %p202 = por %p200, %p201
      %p204 = scmp.ne.s32.totalorder %s189, %s203
      %p205 = scmp.eq.s32.totalorder %s27, 0
      %p206 = por %p204, %p205
      %s208 = sadd.s32 %s207, 1
      %p211 = scmp.eq.s32.totalorder %s21, 1
      %p212 = scmp.ne.s32.totalorder %s207, %s209
      %p213 = scmp.eq.s32.totalorder %s21, 0
      %p214 = por %p212, %p213
      %p215 = scmp.ne.s32.totalorder %s207, %s209
      %p216 = scmp.eq.s32.totalorder %s26, 1
      %p217 = por %p215, %p216
      %p218 = scmp.ne.s32.totalorder %s209, %s210
      %p219 = scmp.eq.s32.totalorder %s26, 0
      %p220 = por %p218, %p219
      %p221 = scmp.ne.s32.totalorder %s209, %s210
      %p222 = scmp.eq.s32.totalorder %s27, 1
      %p223 = por %p221, %p222
      %p225 = scmp.ne.s32.totalorder %s210, %s224
      %p226 = scmp.eq.s32.totalorder %s27, 0
      %p227 = por %p225, %p226
      %s228 = ssub.s32 %s21, %s28
      %p229 = scmp.eq.s32.totalorder %s228, 0
      %s231 = sadd.s32 %s230, 1
      %s232 = scalar_select %p229, %s230, %s231
      %p235 = pneg %p229
      %p236 = scmp.eq.s32.totalorder %s21, 1
      %p237 = por %p235, %p236
      %p238 = scmp.ne.s32.totalorder %s230, %s233
      %p239 = scmp.eq.s32.totalorder %s21, 0
      %p240 = por %p238, %p239
      %p241 = scmp.ne.s32.totalorder %s230, %s233
      %p242 = scmp.eq.s32.totalorder %s26, 1
      %p243 = por %p241, %p242
      %p244 = scmp.ne.s32.totalorder %s233, %s234
      %p245 = scmp.eq.s32.totalorder %s26, 0
      %p246 = por %p244, %p245
      %p247 = scmp.ne.s32.totalorder %s233, %s234
      %p248 = scmp.eq.s32.totalorder %s27, 1
      %p249 = por %p247, %p248
      %p251 = scmp.ne.s32.totalorder %s234, %s250
      %p252 = scmp.eq.s32.totalorder %s27, 0
      %p253 = por %p251, %p252
      %p254 = scmp.le.s32.totalorder 1, %s21
      %p255 = scmp.lt.s32.totalorder %s21, 3
      %p256 = pnand %p254, %p255
      %p257 = pneg %p256
      // Predicated region
      $region9: #{tpu_custom_call.1} parent=5 // pred_check
        _
      $region10: #{tpu_custom_call.1} parent=5 // pred_check_branch
        %259 = sbr.rel (%p256) target = $region12
      $region11: #{tpu_custom_call.1} parent=5 // pred_region
        %s260 = ssub.s32 %s21, 1
        // Predicated region
        $region13: #{tpu_custom_call.1} parent=11 // pred_check
          %p261 = pneg %p94
        $region14: #{tpu_custom_call.1} parent=11 // pred_check_branch
          %263 = sbr.rel (%p261) target = $region16
        $region15: #{tpu_custom_call.1} parent=11 // pred_region
          %s265 = ssub.s32 512, 512
          %266 = vsyncadd [#allocation3], %s265
          %s267 = sshll.u32 [#allocation2], 4
          %s268 = int_to_ptr.vmem [resolvable:$true] %s267
          %273 = dma.hbm_to_vmem [thread:$0]  %s2, 512, %s268, [#allocation3], 128, 128, 8
        $region16: #{tpu_custom_call.1} parent=11 // pred_fallthru
          _
        // Predicated region
        $region17: #{tpu_custom_call.1} parent=11 // pred_check
          %p274 = pneg %p115
        $region18: #{tpu_custom_call.1} parent=11 // pred_check_branch
          %276 = sbr.rel (%p274) target = $region20
        $region19: #{tpu_custom_call.1} parent=11 // pred_region
          _
        $region20: #{tpu_custom_call.1} parent=11 // pred_fallthru
          _
        // Predicated region
        $region21: #{tpu_custom_call.1} parent=11 // pred_check
          %p277 = pneg %p136
        $region22: #{tpu_custom_call.1} parent=11 // pred_check_branch
          %279 = sbr.rel (%p277) target = $region24
        $region23: #{tpu_custom_call.1} parent=11 // pred_region
          %s281 = ssub.s32 32, 32
          %282 = vsyncadd [#allocation6], %s281
          %s284 = sshll.u32 [#allocation5], 4
          %s285 = int_to_ptr.vmem [resolvable:$true] %s284
          %287 = dma.hbm_to_vmem [thread:$0]  %s4, 32, %s285, [#allocation6]
        $region24: #{tpu_custom_call.1} parent=11 // pred_fallthru
          _
        // Predicated region
        $region25: #{tpu_custom_call.1} parent=11 // pred_check
          %p288 = pneg %p157
        $region26: #{tpu_custom_call.1} parent=11 // pred_check_branch
          %290 = sbr.rel (%p288) target = $region28
        $region27: #{tpu_custom_call.1} parent=11 // pred_region
          %s292 = ssub.s32 4096, 4096
          %293 = vsyncadd [#allocation6], %s292
          %s294 = sshll.u32 [#allocation7], 4
          %s295 = int_to_ptr.vmem [resolvable:$true] %s294
          %300 = dma.hbm_to_vmem [thread:$0]  %s5, 4096, %s295, [#allocation6], 128, 128, 8
        $region28: #{tpu_custom_call.1} parent=11 // pred_fallthru
          _
        // Predicated region
        $region29: #{tpu_custom_call.1} parent=11 // pred_check
          %p301 = pneg %p178
        $region30: #{tpu_custom_call.1} parent=11 // pred_check_branch
          %303 = sbr.rel (%p301) target = $region32
        $region31: #{tpu_custom_call.1} parent=11 // pred_region
          _
        $region32: #{tpu_custom_call.1} parent=11 // pred_fallthru
          _
        // Predicated region
        $region33: #{tpu_custom_call.1} parent=11 // pred_check
          %p304 = pneg %p199
        $region34: #{tpu_custom_call.1} parent=11 // pred_check_branch
          %306 = sbr.rel (%p304) target = $region36
        $region35: #{tpu_custom_call.1} parent=11 // pred_region
          %s308 = ssub.s32 14336, 14336
          %309 = vsyncadd [#allocation9], %s308
          %s310 = sshll.u32 [#allocation8], 4
          %s311 = int_to_ptr.vmem [resolvable:$true] %s310
          %316 = dma.hbm_to_vmem [thread:$0]  %s7, 14336, %s311, [#allocation9], 448, 448, 28
        $region36: #{tpu_custom_call.1} parent=11 // pred_fallthru
          _
        // Predicated region
        $region37: #{tpu_custom_call.1} parent=11 // pred_check
          %p317 = pneg %p220
        $region38: #{tpu_custom_call.1} parent=11 // pred_check_branch
          %319 = sbr.rel (%p317) target = $region40
        $region39: #{tpu_custom_call.1} parent=11 // pred_region
          _
        $region40: #{tpu_custom_call.1} parent=11 // pred_fallthru
          _
      $region12: #{tpu_custom_call.1} parent=5 // pred_fallthru
        _
      %p320 = scmp.lt.s32.totalorder %s21, 2
      // Predicated region
      $region41: #{tpu_custom_call.1} parent=5 // pred_check
        %p321 = pneg %p320
      $region42: #{tpu_custom_call.1} parent=5 // pred_check_branch
        %323 = sbr.rel (%p321) target = $region44
      $region43: #{tpu_custom_call.1} parent=5 // pred_region
        // Predicated region
        $region45: #{tpu_custom_call.1} parent=43 // pred_check
          %p324 = pneg %p41
        $region46: #{tpu_custom_call.1} parent=43 // pred_check_branch
          %326 = sbr.rel (%p324) target = $region48
        $region47: #{tpu_custom_call.1} parent=43 // pred_region
          %s327 = smul.u32 2, %s21
          %p328 = scmp.lt.s32.totalorder %s327, 3
          %s329 = scalar_select %p328, %s327, 3
          %s330 = smul.addr %s329, 4
          %s331 = scalar_lea.vmem %s0, %s330
          %s332 = smul.u32 2, %s21
        $region48: #{tpu_custom_call.1} parent=43 // pred_fallthru
          _
        // Predicated region
        $region49: #{tpu_custom_call.1} parent=43 // pred_check
          %p333 = pneg %p67
        $region50: #{tpu_custom_call.1} parent=43 // pred_check_branch
          %335 = sbr.rel (%p333) target = $region52
        $region51: #{tpu_custom_call.1} parent=43 // pred_region
          %s336 = smul.u32 2, %s21
          %p337 = scmp.lt.s32.totalorder %s336, 3
          %s338 = scalar_select %p337, %s336, 3
          %s339 = smul.addr %s338, 4
          %s340 = scalar_lea.vmem %s1, %s339
          %s341 = smul.u32 2, %s21
        $region52: #{tpu_custom_call.1} parent=43 // pred_fallthru
          _
      $region44: #{tpu_custom_call.1} parent=5 // pred_fallthru
        _
      %p342 = scmp.le.s32.totalorder 1, %s21
      %p343 = scmp.lt.s32.totalorder %s21, 3
      %p344 = pnand %p342, %p343
      %p345 = pneg %p344
      // Predicated region
      $region53: #{tpu_custom_call.1} parent=5 // pred_check
        _
      $region54: #{tpu_custom_call.1} parent=5 // pred_check_branch
        %347 = sbr.rel (%p344) target = $region56
      $region55: #{tpu_custom_call.1} parent=5 // pred_region
        %s348 = ssub.s32 %s21, 1
        // Predicated region
        $region57: #{tpu_custom_call.1} parent=55 // pred_check
          %p349 = pneg %p94
        $region58: #{tpu_custom_call.1} parent=55 // pred_check_branch
          %351 = sbr.rel (%p349) target = $region60
        $region59: #{tpu_custom_call.1} parent=55 // pred_region
          %352 = dma.done [#allocation3], 512
        $region60: #{tpu_custom_call.1} parent=55 // pred_fallthru
          _
        // Predicated region
        $region61: #{tpu_custom_call.1} parent=55 // pred_check
          %p353 = pneg %p136
        $region62: #{tpu_custom_call.1} parent=55 // pred_check_branch
          %355 = sbr.rel (%p353) target = $region64
        $region63: #{tpu_custom_call.1} parent=55 // pred_region
          %356 = dma.done [#allocation6], 32
        $region64: #{tpu_custom_call.1} parent=55 // pred_fallthru
          _
        // Predicated region
        $region65: #{tpu_custom_call.1} parent=55 // pred_check
          %p357 = pneg %p157
        $region66: #{tpu_custom_call.1} parent=55 // pred_check_branch
          %359 = sbr.rel (%p357) target = $region68
        $region67: #{tpu_custom_call.1} parent=55 // pred_region
          %360 = dma.done [#allocation6], 4096
        $region68: #{tpu_custom_call.1} parent=55 // pred_fallthru
          _
        // Predicated region
        $region69: #{tpu_custom_call.1} parent=55 // pred_check
          %p361 = pneg %p199
        $region70: #{tpu_custom_call.1} parent=55 // pred_check_branch
          %363 = sbr.rel (%p361) target = $region72
        $region71: #{tpu_custom_call.1} parent=55 // pred_region
          %364 = dma.done [#allocation9], 14336
        $region72: #{tpu_custom_call.1} parent=55 // pred_fallthru
          _
        %s365 = smul.u32 2, %s26
        %p366 = scmp.lt.s32.totalorder %s365, 3
        %s367 = scalar_select %p366, %s365, 3
        %s368 = smul.addr %s367, 4
        %s369 = scalar_lea.vmem %s0, %s368
        %p370 = pneg %p47
        %p371 = pneg %p44
        %s372 = smul.u32 2, %s26
        %p373 = scmp.lt.s32.totalorder %s372, 3
        %s374 = scalar_select %p373, %s372, 3
        %s375 = smul.addr %s374, 4
        %s376 = scalar_lea.vmem %s1, %s375
        %p377 = pneg %p73
        %p378 = pneg %p70
        %p379 = pneg %p94
        %p380 = pneg %p91
        %p381 = pneg %p115
        %p382 = pneg %p112
        %p383 = pneg %p136
        %p384 = pneg %p133
        %p385 = pneg %p157
        %p386 = pneg %p154
        %p387 = pneg %p178
        %p388 = pneg %p175
        %p389 = pneg %p199
        %p390 = pneg %p196
        %p391 = pneg %p220
        %p392 = pneg %p217
        %p393 = pneg %p246
        %p394 = pneg %p243
        %s395 = sand.u32 %s233, 1
        %s396 = scalar_lea.sflag [#allocation4], %s395
        %s397 = sand.u32 %s233, 1
        %s398 = smul.addr %s397, 56
        %s399 = scalar_lea.vmem [#allocation10], %s398
        %s400 = smul.u32 2, %s26
        %p401 = scmp.lt.s32.totalorder %s400, 3
        %s402 = scalar_select %p401, %s400, 3
        %s403 = smul.addr %s402, 4
        %s404 = scalar_lea.vmem %s0, %s403
        %s405 = smul.u32 2, %s26
        %s406 = smul.u32 2, %s26
        %p407 = scmp.lt.s32.totalorder %s406, 3
        %s408 = scalar_select %p407, %s406, 3
        %s409 = smul.addr %s408, 4
        %s410 = scalar_lea.vmem %s1, %s409
        %s411 = smul.u32 2, %s26
        %s412 = smul.u32 2, %s26
        %v414 = vld [vmem:[%s404] sm:$0xf]
        %v415 = vld [vmem:[%s404 + $0x4] sm:$0xf]
        %v416 = vld [vmem:[#allocation2] sm:$0xff]
        %v417 = vld [vmem:[#allocation2 + $0x8] sm:$0xff]
        %v418 = vld [vmem:[#allocation2 + $0x10] sm:$0xff]
        %v419 = vld [vmem:[#allocation2 + $0x18] sm:$0xff]
        %v420 = vld [vmem:[%s410] sm:$0xf]
        %v421 = vld [vmem:[%s410 + $0x4] sm:$0xf]
        %v422 = vld [vmem:[%s3] sm:$0xff]
        %v423 = vld [vmem:[%s3 + $0x8] sm:$0x11]
        %v426 = vunpack.c.l.b16 %v420
        %v427 = vunpack.c.l.b16 %v421
        %v428 = vpack.c.b16 %v427, %v426
        %v431 = vunpack.c.l.b16 %v422
        %v432 = vunpack.c.h.b16 %v422
        %v433 = vunpack.c.l.b16 %v423
        %v434 = vunpack.c.h.b16 %v423
        %v435 = vpack.c.b16 %v433, %v431
        %v436 = vpack.c.b16 %v434, %v432
        %vm437 = vcmask 80896
        %v439 = vsel %vm437, %v428, 0
        %vm441 = vcmask 1044480
        %v443 = vsel %vm441, %v435, 0
        %v446 = vsel %vm441, %v436, 0
        %448 = vmatprep.subr.bf16.mxu0 %v446
        %449 = vmatpush1.bf16.msra.mxu0 %v443
        %450 = vmatprep.subr.bf16.mxu0 0
        %451 = vmatpush1.bf16.msra.mxu0 0
        %452 = vmatprep.subr.bf16.mxu0 0
        %453 = vmatpush1.bf16.msra.mxu0 0
        %454 = vmatprep.subr.bf16.mxu0 0
        %455 = vmatpush1.bf16.msra.mxu0 0
        %456 = vmatprep.subr.bf16.mxu0 0
        %457 = vmatpush1.bf16.msra.mxu0 0
        %458 = vmatprep.subr.bf16.mxu0 0
        %459 = vmatpush1.bf16.msra.mxu0 0
        %460 = vmatprep.subr.bf16.mxu0 0
        %461 = vmatpush1.bf16.msra.mxu0 0
        %462 = vmatprep.subr.bf16.mxu0 0
        %463 = vmatpush1.bf16.msra.mxu0 0
        %464 = vmatprep.subr.bf16.mxu0 0
        %465 = vmatpush1.bf16.msra.mxu0 0
        %466 = vmatprep.subr.bf16.mxu0 0
        %467 = vmatpush1.bf16.msra.mxu0 0
        %468 = vmatprep.subr.bf16.mxu0 0
        %469 = vmatpush1.bf16.msra.mxu0 0
        %470 = vmatprep.subr.bf16.mxu0 0
        %471 = vmatpush1.bf16.msra.mxu0 0
        %472 = vmatprep.subr.bf16.mxu0 0
        %473 = vmatpush1.bf16.msra.mxu0 0
        %474 = vmatprep.subr.bf16.mxu0 0
        %475 = vmatpush1.bf16.msra.mxu0 0
        %476 = vmatprep.subr.bf16.mxu0 0
        %477 = vmatpush1.bf16.msra.mxu0 0
        %478 = vmatprep.subr.bf16.mxu0 0
        %479 = vmatpush1.bf16.msra.mxu0 0
        %480 = vmatprep.mubr.bf16.mxu0 0
        %481 = vmatmul.mubr.bf16.gmra.mrb[0].mxu0 %v439
        %v482 = vpop.f32.mrb[0].mxu0
        %v483 = vadd.f32 0.0, %v482
        %v484 = vpop.f32.mrb[0].mxu0
        %v485 = vadd.f32 0.0, %v484
        %v486 = vpop.f32.mrb[0].mxu0
        %v487 = vadd.f32 0.0, %v486
        %v488 = vpop.f32.mrb[0].mxu0
        %v489 = vadd.f32 0.0, %v488
        %490 = vdwg.mxu0
        %v493 = vunpack.c.l.b16 %v414
        %v494 = vunpack.c.l.b16 %v415
        %v495 = vpack.c.b16 %v494, %v493
        %v500 = vunpack.c.l.b16 %v416
        %v501 = vunpack.c.h.b16 %v416
        %v502 = vunpack.c.l.b16 %v417
        %v503 = vunpack.c.h.b16 %v417
        %v504 = vunpack.c.l.b16 %v418
        %v505 = vunpack.c.h.b16 %v418
        %v506 = vunpack.c.l.b16 %v419
        %v507 = vunpack.c.h.b16 %v419
        %v508 = vpack.c.b16 %v502, %v500
        %v509 = vpack.c.b16 %v503, %v501
        %v510 = vpack.c.b16 %v506, %v504
        %v511 = vpack.c.b16 %v507, %v505
        %vm516 = vcmask 261120
        %v518 = vsel %vm516, %v495, 0
        %520 = vmatprep.subr.bf16.mxu0 %v509
        %521 = vmatpush1.bf16.msra.mxu0 %v508
        %522 = vmatprep.subr.bf16.mxu0 %v511
        %523 = vmatpush1.bf16.msra.mxu0 %v510
        %524 = vmatprep.subr.bf16.mxu0 0
        %525 = vmatpush1.bf16.msra.mxu0 0
        %526 = vmatprep.subr.bf16.mxu0 0
        %527 = vmatpush1.bf16.msra.mxu0 0
        %528 = vmatprep.subr.bf16.mxu0 0
        %529 = vmatpush1.bf16.msra.mxu0 0
        %530 = vmatprep.subr.bf16.mxu0 0
        %531 = vmatpush1.bf16.msra.mxu0 0
        %532 = vmatprep.subr.bf16.mxu0 0
        %533 = vmatpush1.bf16.msra.mxu0 0
        %534 = vmatprep.subr.bf16.mxu0 0
        %535 = vmatpush1.bf16.msra.mxu0 0
        %536 = vmatprep.subr.bf16.mxu0 0
        %537 = vmatpush1.bf16.msra.mxu0 0
        %538 = vmatprep.subr.bf16.mxu0 0
        %539 = vmatpush1.bf16.msra.mxu0 0
        %540 = vmatprep.subr.bf16.mxu0 0
        %541 = vmatpush1.bf16.msra.mxu0 0
        %542 = vmatprep.subr.bf16.mxu0 0
        %543 = vmatpush1.bf16.msra.mxu0 0
        %544 = vmatprep.subr.bf16.mxu0 0
        %545 = vmatpush1.bf16.msra.mxu0 0
        %546 = vmatprep.subr.bf16.mxu0 0
        %547 = vmatpush1.bf16.msra.mxu0 0
        %548 = vmatprep.subr.bf16.mxu0 0
        %549 = vmatpush1.bf16.msra.mxu0 0
        %550 = vmatprep.subr.bf16.mxu0 0
        %551 = vmatpush1.bf16.msra.mxu0 0
        %552 = vmatprep.mubr.bf16.mxu0 0
        %553 = vmatmul.mubr.bf16.gmra.mrb[0].mxu0 %v518
        %v554 = vpop.f32.mrb[0].mxu0
        %v555 = vadd.f32 %v483, %v554
        %v556 = vpop.f32.mrb[0].mxu0
        %v557 = vadd.f32 %v485, %v556
        %v558 = vpop.f32.mrb[0].mxu0
        %v559 = vadd.f32 %v487, %v558
        %v560 = vpop.f32.mrb[0].mxu0
        %v561 = vadd.f32 %v489, %v560
        %562 = vdwg.mxu0
        %v563 = vld [vmem:[#allocation5] sm:$0x3]
        %v565 = vlaneseq
        %v566 = vshrl.u32 %v565, 7
        %v567 = vsub.s32 0, %v566
        %v568 = vrot.slane %v563, %v567
        %v569 = vlaneseq
        %v570 = vshrl.u32 %v569, 7
        %v571 = vsub.s32 1, %v570
        %v572 = vrot.slane %v563, %v571
        %v575 = vadd.f32 %v555, %v568
        %v576 = vadd.f32 %v557, %v572
        %v577 = vadd.f32 %v559, %v568
        %v578 = vadd.f32 %v561, %v572
        %v579 = vmax.f32 %v575, 0.0
        %v580 = vmax.f32 %v576, 0.0
        %v581 = vmax.f32 %v577, 0.0
        %v582 = vmax.f32 %v578, 0.0
        %v583 = vpack.c.bf16 %v581, %v579
        %v584 = vpack.c.bf16 %v582, %v580
        %v585 = vld [vmem:[#allocation7] sm:$0xff]
        %v586 = vld [vmem:[#allocation7 + $0x8] sm:$0xff]
        %v587 = vld [vmem:[#allocation7 + $0x10] sm:$0xff]
        %v588 = vld [vmem:[#allocation7 + $0x18] sm:$0xff]
        %v589 = vld [vmem:[#allocation7 + $0x20] sm:$0xff]
        %v590 = vld [vmem:[#allocation7 + $0x28] sm:$0xff]
        %v591 = vld [vmem:[#allocation7 + $0x30] sm:$0xff]
        %v592 = vld [vmem:[#allocation7 + $0x38] sm:$0xff]
        %v593 = vld [vmem:[#allocation7 + $0x40] sm:$0xff]
        %v594 = vld [vmem:[#allocation7 + $0x48] sm:$0xff]
        %v595 = vld [vmem:[#allocation7 + $0x50] sm:$0xff]
        %v596 = vld [vmem:[#allocation7 + $0x58] sm:$0xff]
        %v597 = vld [vmem:[#allocation7 + $0x60] sm:$0xff]
        %v598 = vld [vmem:[#allocation7 + $0x68] sm:$0xff]
        %v599 = vld [vmem:[#allocation7 + $0x70] sm:$0xff]
        %v600 = vld [vmem:[#allocation7 + $0x78] sm:$0xff]
        %v601 = vld [vmem:[#allocation7 + $0x80] sm:$0xff]
        %v602 = vld [vmem:[#allocation7 + $0x88] sm:$0xff]
        %v603 = vld [vmem:[#allocation7 + $0x90] sm:$0xff]
        %v604 = vld [vmem:[#allocation7 + $0x98] sm:$0xff]
        %v605 = vld [vmem:[#allocation7 + $0xa0] sm:$0xff]
        %v606 = vld [vmem:[#allocation7 + $0xa8] sm:$0xff]
        %v607 = vld [vmem:[#allocation7 + $0xb0] sm:$0xff]
        %v608 = vld [vmem:[#allocation7 + $0xb8] sm:$0xff]
        %v609 = vld [vmem:[#allocation7 + $0xc0] sm:$0xff]
        %v610 = vld [vmem:[#allocation7 + $0xc8] sm:$0xff]
        %v611 = vld [vmem:[#allocation7 + $0xd0] sm:$0xff]
        %v612 = vld [vmem:[#allocation7 + $0xd8] sm:$0xff]
        %v613 = vld [vmem:[#allocation7 + $0xe0] sm:$0xff]
        %v614 = vld [vmem:[#allocation7 + $0xe8] sm:$0xff]
        %v615 = vld [vmem:[#allocation7 + $0xf0] sm:$0xff]
        %v616 = vld [vmem:[#allocation7 + $0xf8] sm:$0xff]
        %v617 = vld [vmem:[%s6] sm:$0x3]
        %v619 = vlaneseq
        %v620 = vshrl.u32 %v619, 7
        %v621 = vsub.s32 0, %v620
        %v622 = vrot.slane %v617, %v621
        %v623 = vlaneseq
        %v624 = vshrl.u32 %v623, 7
        %v625 = vsub.s32 1, %v624
        %v626 = vrot.slane %v617, %v625
        %v661 = vunpack.c.l.b16 %v585
        %v662 = vunpack.c.h.b16 %v585
        %v663 = vunpack.c.l.b16 %v586
        %v664 = vunpack.c.h.b16 %v586
        %v665 = vunpack.c.l.b16 %v587
        %v666 = vunpack.c.h.b16 %v587
        %v667 = vunpack.c.l.b16 %v588
        %v668 = vunpack.c.h.b16 %v588
        %v669 = vunpack.c.l.b16 %v589
        %v670 = vunpack.c.h.b16 %v589
        %v671 = vunpack.c.l.b16 %v590
        %v672 = vunpack.c.h.b16 %v590
        %v673 = vunpack.c.l.b16 %v591
        %v674 = vunpack.c.h.b16 %v591
        %v675 = vunpack.c.l.b16 %v592
        %v676 = vunpack.c.h.b16 %v592
        %v677 = vunpack.c.l.b16 %v593
        %v678 = vunpack.c.h.b16 %v593
        %v679 = vunpack.c.l.b16 %v594
        %v680 = vunpack.c.h.b16 %v594
        %v681 = vunpack.c.l.b16 %v595
        %v682 = vunpack.c.h.b16 %v595
        %v683 = vunpack.c.l.b16 %v596
        %v684 = vunpack.c.h.b16 %v596
        %v685 = vunpack.c.l.b16 %v597
        %v686 = vunpack.c.h.b16 %v597
        %v687 = vunpack.c.l.b16 %v598
        %v688 = vunpack.c.h.b16 %v598
        %v689 = vunpack.c.l.b16 %v599
        %v690 = vunpack.c.h.b16 %v599
        %v691 = vunpack.c.l.b16 %v600
        %v692 = vunpack.c.h.b16 %v600
        %v693 = vunpack.c.l.b16 %v601
        %v694 = vunpack.c.h.b16 %v601
        %v695 = vunpack.c.l.b16 %v602
        %v696 = vunpack.c.h.b16 %v602
        %v697 = vunpack.c.l.b16 %v603
        %v698 = vunpack.c.h.b16 %v603
        %v699 = vunpack.c.l.b16 %v604
        %v700 = vunpack.c.h.b16 %v604
        %v701 = vunpack.c.l.b16 %v605
        %v702 = vunpack.c.h.b16 %v605
        %v703 = vunpack.c.l.b16 %v606
        %v704 = vunpack.c.h.b16 %v606
        %v705 = vunpack.c.l.b16 %v607
        %v706 = vunpack.c.h.b16 %v607
        %v707 = vunpack.c.l.b16 %v608
        %v708 = vunpack.c.h.b16 %v608
        %v709 = vunpack.c.l.b16 %v609
        %v710 = vunpack.c.h.b16 %v609
        %v711 = vunpack.c.l.b16 %v610
        %v712 = vunpack.c.h.b16 %v610
        %v713 = vunpack.c.l.b16 %v611
        %v714 = vunpack.c.h.b16 %v611
        %v715 = vunpack.c.l.b16 %v612
        %v716 = vunpack.c.h.b16 %v612
        %v717 = vunpack.c.l.b16 %v613
        %v718 = vunpack.c.h.b16 %v613
        %v719 = vunpack.c.l.b16 %v614
        %v720 = vunpack.c.h.b16 %v614
        %v721 = vunpack.c.l.b16 %v615
        %v722 = vunpack.c.h.b16 %v615
        %v723 = vunpack.c.l.b16 %v616
        %v724 = vunpack.c.h.b16 %v616
        %v725 = vpack.c.b16 %v663, %v661
        %v726 = vpack.c.b16 %v664, %v662
        %v727 = vpack.c.b16 %v667, %v665
        %v728 = vpack.c.b16 %v668, %v666
        %v729 = vpack.c.b16 %v671, %v669
        %v730 = vpack.c.b16 %v672, %v670
        %v731 = vpack.c.b16 %v675, %v673
        %v732 = vpack.c.b16 %v676, %v674
        %v733 = vpack.c.b16 %v679, %v677
        %v734 = vpack.c.b16 %v680, %v678
        %v735 = vpack.c.b16 %v683, %v681
        %v736 = vpack.c.b16 %v684, %v682
        %v737 = vpack.c.b16 %v687, %v685
        %v738 = vpack.c.b16 %v688, %v686
        %v739 = vpack.c.b16 %v691, %v689
        %v740 = vpack.c.b16 %v692, %v690
        %v741 = vpack.c.b16 %v695, %v693
        %v742 = vpack.c.b16 %v696, %v694
        %v743 = vpack.c.b16 %v699, %v697
        %v744 = vpack.c.b16 %v700, %v698
        %v745 = vpack.c.b16 %v703, %v701
        %v746 = vpack.c.b16 %v704, %v702
        %v747 = vpack.c.b16 %v707, %v705
        %v748 = vpack.c.b16 %v708, %v706
        %v749 = vpack.c.b16 %v711, %v709
        %v750 = vpack.c.b16 %v712, %v710
        %v751 = vpack.c.b16 %v715, %v713
        %v752 = vpack.c.b16 %v716, %v714
        %v753 = vpack.c.b16 %v719, %v717
        %v754 = vpack.c.b16 %v720, %v718
        %v755 = vpack.c.b16 %v723, %v721
        %v756 = vpack.c.b16 %v724, %v722
        %789 = vmatprep.subr.bf16.mxu0 %v726
        %790 = vmatpush1.bf16.msra.mxu0 %v725
        %791 = vmatprep.subr.bf16.mxu0 %v728
        %792 = vmatpush1.bf16.msra.mxu0 %v727
        %793 = vmatprep.subr.bf16.mxu0 %v730
        %794 = vmatpush1.bf16.msra.mxu0 %v729
        %795 = vmatprep.subr.bf16.mxu0 %v732
        %796 = vmatpush1.bf16.msra.mxu0 %v731
        %797 = vmatprep.subr.bf16.mxu0 %v734
        %798 = vmatpush1.bf16.msra.mxu0 %v733
        %799 = vmatprep.subr.bf16.mxu0 %v736
        %800 = vmatpush1.bf16.msra.mxu0 %v735
        %801 = vmatprep.subr.bf16.mxu0 %v738
        %802 = vmatpush1.bf16.msra.mxu0 %v737
        %803 = vmatprep.subr.bf16.mxu0 %v740
        %804 = vmatpush1.bf16.msra.mxu0 %v739
        %805 = vmatprep.subr.bf16.mxu0 %v742
        %806 = vmatpush1.bf16.msra.mxu0 %v741
        %807 = vmatprep.subr.bf16.mxu0 %v744
        %808 = vmatpush1.bf16.msra.mxu0 %v743
        %809 = vmatprep.subr.bf16.mxu0 %v746
        %810 = vmatpush1.bf16.msra.mxu0 %v745
        %811 = vmatprep.subr.bf16.mxu0 %v748
        %812 = vmatpush1.bf16.msra.mxu0 %v747
        %813 = vmatprep.subr.bf16.mxu0 %v750
        %814 = vmatpush1.bf16.msra.mxu0 %v749
        %815 = vmatprep.subr.bf16.mxu0 %v752
        %816 = vmatpush1.bf16.msra.mxu0 %v751
        %817 = vmatprep.subr.bf16.mxu0 %v754
        %818 = vmatpush1.bf16.msra.mxu0 %v753
        %819 = vmatprep.subr.bf16.mxu0 %v756
        %820 = vmatpush1.bf16.msra.mxu0 %v755
        %821 = vmatprep.mubr.bf16.mxu0 %v584
        %822 = vmatmul.mubr.bf16.gmra.mrb[0].mxu0 %v583
        %v823 = vpop.f32.mrb[0].mxu0
        %v824 = vadd.f32 %v622, %v823
        %v825 = vpop.f32.mrb[0].mxu0
        %v826 = vadd.f32 %v626, %v825
        %v827 = vpop.f32.mrb[0].mxu0
        %v828 = vadd.f32 %v622, %v827
        %v829 = vpop.f32.mrb[0].mxu0
        %v830 = vadd.f32 %v626, %v829
        %831 = vdwg.mxu0
        %v832 = vmax.f32 %v824, 0.0
        %v833 = vmax.f32 %v826, 0.0
        %v834 = vmax.f32 %v828, 0.0
        %v835 = vmax.f32 %v830, 0.0
        %v836 = vpack.c.bf16 %v834, %v832
        %v837 = vpack.c.bf16 %v835, %v833
        %v838 = vld [vmem:[#allocation8] sm:$0xff]
        %v839 = vld [vmem:[#allocation8 + $0x8] sm:$0xff]
        %v840 = vld [vmem:[#allocation8 + $0x10] sm:$0xff]
        %v841 = vld [vmem:[#allocation8 + $0x18] sm:$0xf]
        %v842 = vld [vmem:[#allocation8 + $0x1c] sm:$0xff]
        %v843 = vld [vmem:[#allocation8 + $0x24] sm:$0xff]
        %v844 = vld [vmem:[#allocation8 + $0x2c] sm:$0xff]
        %v845 = vld [vmem:[#allocation8 + $0x34] sm:$0xf]
        %v846 = vld [vmem:[#allocation8 + $0x38] sm:$0xff]
        %v847 = vld [vmem:[#allocation8 + $0x40] sm:$0xff]
        %v848 = vld [vmem:[#allocation8 + $0x48] sm:$0xff]
        %v849 = vld [vmem:[#allocation8 + $0x50] sm:$0xf]
        %v850 = vld [vmem:[#allocation8 + $0x54] sm:$0xff]
        %v851 = vld [vmem:[#allocation8 + $0x5c] sm:$0xff]
        %v852 = vld [vmem:[#allocation8 + $0x64] sm:$0xff]
        %v853 = vld [vmem:[#allocation8 + $0x6c] sm:$0xf]
        %v854 = vld [vmem:[#allocation8 + $0x70] sm:$0xff]
        %v855 = vld [vmem:[#allocation8 + $0x78] sm:$0xff]
        %v856 = vld [vmem:[#allocation8 + $0x80] sm:$0xff]
        %v857 = vld [vmem:[#allocation8 + $0x88] sm:$0xf]
        %v858 = vld [vmem:[#allocation8 + $0x8c] sm:$0xff]
        %v859 = vld [vmem:[#allocation8 + $0x94] sm:$0xff]
        %v860 = vld [vmem:[#allocation8 + $0x9c] sm:$0xff]
        %v861 = vld [vmem:[#allocation8 + $0xa4] sm:$0xf]
        %v862 = vld [vmem:[#allocation8 + $0xa8] sm:$0xff]
        %v863 = vld [vmem:[#allocation8 + $0xb0] sm:$0xff]
        %v864 = vld [vmem:[#allocation8 + $0xb8] sm:$0xff]
        %v865 = vld [vmem:[#allocation8 + $0xc0] sm:$0xf]
        %v866 = vld [vmem:[#allocation8 + $0xc4] sm:$0xff]
        %v867 = vld [vmem:[#allocation8 + $0xcc] sm:$0xff]
        %v868 = vld [vmem:[#allocation8 + $0xd4] sm:$0xff]
        %v869 = vld [vmem:[#allocation8 + $0xdc] sm:$0xf]
        %v870 = vld [vmem:[#allocation8 + $0xe0] sm:$0xff]
        %v871 = vld [vmem:[#allocation8 + $0xe8] sm:$0xff]
        %v872 = vld [vmem:[#allocation8 + $0xf0] sm:$0xff]
        %v873 = vld [vmem:[#allocation8 + $0xf8] sm:$0xf]
        %v874 = vld [vmem:[#allocation8 + $0xfc] sm:$0xff]
        %v875 = vld [vmem:[#allocation8 + $0x104] sm:$0xff]
        %v876 = vld [vmem:[#allocation8 + $0x10c] sm:$0xff]
        %v877 = vld [vmem:[#allocation8 + $0x114] sm:$0xf]
        %v878 = vld [vmem:[#allocation8 + $0x118] sm:$0xff]
        %v879 = vld [vmem:[#allocation8 + $0x120] sm:$0xff]
        %v880 = vld [vmem:[#allocation8 + $0x128] sm:$0xff]
        %v881 = vld [vmem:[#allocation8 + $0x130] sm:$0xf]
        %v882 = vld [vmem:[#allocation8 + $0x134] sm:$0xff]
        %v883 = vld [vmem:[#allocation8 + $0x13c] sm:$0xff]
        %v884 = vld [vmem:[#allocation8 + $0x144] sm:$0xff]
        %v885 = vld [vmem:[#allocation8 + $0x14c] sm:$0xf]
        %v886 = vld [vmem:[#allocation8 + $0x150] sm:$0xff]
        %v887 = vld [vmem:[#allocation8 + $0x158] sm:$0xff]
        %v888 = vld [vmem:[#allocation8 + $0x160] sm:$0xff]
        %v889 = vld [vmem:[#allocation8 + $0x168] sm:$0xf]
        %v890 = vld [vmem:[#allocation8 + $0x16c] sm:$0xff]
        %v891 = vld [vmem:[#allocation8 + $0x174] sm:$0xff]
        %v892 = vld [vmem:[#allocation8 + $0x17c] sm:$0xff]
        %v893 = vld [vmem:[#allocation8 + $0x184] sm:$0xf]
        %v894 = vld [vmem:[#allocation8 + $0x188] sm:$0xff]
        %v895 = vld [vmem:[#allocation8 + $0x190] sm:$0xff]
        %v896 = vld [vmem:[#allocation8 + $0x198] sm:$0xff]
        %v897 = vld [vmem:[#allocation8 + $0x1a0] sm:$0xf]
        %v898 = vld [vmem:[#allocation8 + $0x1a4] sm:$0xff]
        %v899 = vld [vmem:[#allocation8 + $0x1ac] sm:$0xff]
        %v900 = vld [vmem:[#allocation8 + $0x1b4] sm:$0xff]
        %v901 = vld [vmem:[#allocation8 + $0x1bc] sm:$0xf]
        %v902 = vld [vmem:[#allocation8 + $0x1c0] sm:$0xff]
        %v903 = vld [vmem:[#allocation8 + $0x1c8] sm:$0xff]
        %v904 = vld [vmem:[#allocation8 + $0x1d0] sm:$0xff]
        %v905 = vld [vmem:[#allocation8 + $0x1d8] sm:$0xf]
        %v906 = vld [vmem:[#allocation8 + $0x1dc] sm:$0xff]
        %v907 = vld [vmem:[#allocation8 + $0x1e4] sm:$0xff]
        %v908 = vld [vmem:[#allocation8 + $0x1ec] sm:$0xff]
        %v909 = vld [vmem:[#allocation8 + $0x1f4] sm:$0xf]
        %v910 = vld [vmem:[#allocation8 + $0x1f8] sm:$0xff]
        %v911 = vld [vmem:[#allocation8 + $0x200] sm:$0xff]
        %v912 = vld [vmem:[#allocation8 + $0x208] sm:$0xff]
        %v913 = vld [vmem:[#allocation8 + $0x210] sm:$0xf]
        %v914 = vld [vmem:[#allocation8 + $0x214] sm:$0xff]
        %v915 = vld [vmem:[#allocation8 + $0x21c] sm:$0xff]
        %v916 = vld [vmem:[#allocation8 + $0x224] sm:$0xff]
        %v917 = vld [vmem:[#allocation8 + $0x22c] sm:$0xf]
        %v918 = vld [vmem:[#allocation8 + $0x230] sm:$0xff]
        %v919 = vld [vmem:[#allocation8 + $0x238] sm:$0xff]
        %v920 = vld [vmem:[#allocation8 + $0x240] sm:$0xff]
        %v921 = vld [vmem:[#allocation8 + $0x248] sm:$0xf]
        %v922 = vld [vmem:[#allocation8 + $0x24c] sm:$0xff]
        %v923 = vld [vmem:[#allocation8 + $0x254] sm:$0xff]
        %v924 = vld [vmem:[#allocation8 + $0x25c] sm:$0xff]
        %v925 = vld [vmem:[#allocation8 + $0x264] sm:$0xf]
        %v926 = vld [vmem:[#allocation8 + $0x268] sm:$0xff]
        %v927 = vld [vmem:[#allocation8 + $0x270] sm:$0xff]
        %v928 = vld [vmem:[#allocation8 + $0x278] sm:$0xff]
        %v929 = vld [vmem:[#allocation8 + $0x280] sm:$0xf]
        %v930 = vld [vmem:[#allocation8 + $0x284] sm:$0xff]
        %v931 = vld [vmem:[#allocation8 + $0x28c] sm:$0xff]
        %v932 = vld [vmem:[#allocation8 + $0x294] sm:$0xff]
        %v933 = vld [vmem:[#allocation8 + $0x29c] sm:$0xf]
        %v934 = vld [vmem:[#allocation8 + $0x2a0] sm:$0xff]
        %v935 = vld [vmem:[#allocation8 + $0x2a8] sm:$0xff]
        %v936 = vld [vmem:[#allocation8 + $0x2b0] sm:$0xff]
        %v937 = vld [vmem:[#allocation8 + $0x2b8] sm:$0xf]
        %v938 = vld [vmem:[#allocation8 + $0x2bc] sm:$0xff]
        %v939 = vld [vmem:[#allocation8 + $0x2c4] sm:$0xff]
        %v940 = vld [vmem:[#allocation8 + $0x2cc] sm:$0xff]
        %v941 = vld [vmem:[#allocation8 + $0x2d4] sm:$0xf]
        %v942 = vld [vmem:[#allocation8 + $0x2d8] sm:$0xff]
        %v943 = vld [vmem:[#allocation8 + $0x2e0] sm:$0xff]
        %v944 = vld [vmem:[#allocation8 + $0x2e8] sm:$0xff]
        %v945 = vld [vmem:[#allocation8 + $0x2f0] sm:$0xf]
        %v946 = vld [vmem:[#allocation8 + $0x2f4] sm:$0xff]
        %v947 = vld [vmem:[#allocation8 + $0x2fc] sm:$0xff]
        %v948 = vld [vmem:[#allocation8 + $0x304] sm:$0xff]
        %v949 = vld [vmem:[#allocation8 + $0x30c] sm:$0xf]
        %v950 = vld [vmem:[#allocation8 + $0x310] sm:$0xff]
        %v951 = vld [vmem:[#allocation8 + $0x318] sm:$0xff]
        %v952 = vld [vmem:[#allocation8 + $0x320] sm:$0xff]
        %v953 = vld [vmem:[#allocation8 + $0x328] sm:$0xf]
        %v954 = vld [vmem:[#allocation8 + $0x32c] sm:$0xff]
        %v955 = vld [vmem:[#allocation8 + $0x334] sm:$0xff]
        %v956 = vld [vmem:[#allocation8 + $0x33c] sm:$0xff]
        %v957 = vld [vmem:[#allocation8 + $0x344] sm:$0xf]
        %v958 = vld [vmem:[#allocation8 + $0x348] sm:$0xff]
        %v959 = vld [vmem:[#allocation8 + $0x350] sm:$0xff]
        %v960 = vld [vmem:[#allocation8 + $0x358] sm:$0xff]
        %v961 = vld [vmem:[#allocation8 + $0x360] sm:$0xf]
        %v962 = vld [vmem:[#allocation8 + $0x364] sm:$0xff]
        %v963 = vld [vmem:[#allocation8 + $0x36c] sm:$0xff]
        %v964 = vld [vmem:[#allocation8 + $0x374] sm:$0xff]
        %v965 = vld [vmem:[#allocation8 + $0x37c] sm:$0xf]
        %v966 = vld [vmem:[%s8] sm:$0xff]
        %v968 = vlaneseq
        %v969 = vshrl.u32 %v968, 7
        %v970 = vsub.s32 0, %v969
        %v971 = vrot.slane %v966, %v970
        %v972 = vlaneseq
        %v973 = vshrl.u32 %v972, 7
        %v974 = vsub.s32 1, %v973
        %v975 = vrot.slane %v966, %v974
        %v976 = vlaneseq
        %v977 = vshrl.u32 %v976, 7
        %v978 = vsub.s32 2, %v977
        %v979 = vrot.slane %v966, %v978
        %v980 = vlaneseq
        %v981 = vshrl.u32 %v980, 7
        %v982 = vsub.s32 3, %v981
        %v983 = vrot.slane %v966, %v982
        %v984 = vlaneseq
        %v985 = vshrl.u32 %v984, 7
        %v986 = vsub.s32 4, %v985
        %v987 = vrot.slane %v966, %v986
        %v988 = vlaneseq
        %v989 = vshrl.u32 %v988, 7
        %v990 = vsub.s32 5, %v989
        %v991 = vrot.slane %v966, %v990
        %v992 = vlaneseq
        %v993 = vshrl.u32 %v992, 7
        %v994 = vsub.s32 6, %v993
        %v995 = vrot.slane %v966, %v994
        %v1131 = vunpack.c.l.b16 %v838
        %v1132 = vunpack.c.h.b16 %v838
        %v1133 = vunpack.c.l.b16 %v839
        %v1134 = vunpack.c.h.b16 %v839
        %v1135 = vunpack.c.l.b16 %v840
        %v1136 = vunpack.c.h.b16 %v840
        %v1137 = vunpack.c.l.b16 %v841
        %v1138 = vunpack.c.l.b16 %v842
        %v1139 = vunpack.c.h.b16 %v842
        %v1140 = vunpack.c.l.b16 %v843
        %v1141 = vunpack.c.h.b16 %v843
        %v1142 = vunpack.c.l.b16 %v844
        %v1143 = vunpack.c.h.b16 %v844
        %v1144 = vunpack.c.l.b16 %v845
        %v1145 = vunpack.c.l.b16 %v846
        %v1146 = vunpack.c.h.b16 %v846
        %v1147 = vunpack.c.l.b16 %v847
        %v1148 = vunpack.c.h.b16 %v847
        %v1149 = vunpack.c.l.b16 %v848
        %v1150 = vunpack.c.h.b16 %v848
        %v1151 = vunpack.c.l.b16 %v849
        %v1152 = vunpack.c.l.b16 %v850
        %v1153 = vunpack.c.h.b16 %v850
        %v1154 = vunpack.c.l.b16 %v851
        %v1155 = vunpack.c.h.b16 %v851
        %v1156 = vunpack.c.l.b16 %v852
        %v1157 = vunpack.c.h.b16 %v852
        %v1158 = vunpack.c.l.b16 %v853
        %v1159 = vunpack.c.l.b16 %v854
        %v1160 = vunpack.c.h.b16 %v854
        %v1161 = vunpack.c.l.b16 %v855
        %v1162 = vunpack.c.h.b16 %v855
        %v1163 = vunpack.c.l.b16 %v856
        %v1164 = vunpack.c.h.b16 %v856
        %v1165 = vunpack.c.l.b16 %v857
        %v1166 = vunpack.c.l.b16 %v858
        %v1167 = vunpack.c.h.b16 %v858
        %v1168 = vunpack.c.l.b16 %v859
        %v1169 = vunpack.c.h.b16 %v859
        %v1170 = vunpack.c.l.b16 %v860
        %v1171 = vunpack.c.h.b16 %v860
        %v1172 = vunpack.c.l.b16 %v861
        %v1173 = vunpack.c.l.b16 %v862
        %v1174 = vunpack.c.h.b16 %v862
        %v1175 = vunpack.c.l.b16 %v863
        %v1176 = vunpack.c.h.b16 %v863
        %v1177 = vunpack.c.l.b16 %v864
        %v1178 = vunpack.c.h.b16 %v864
        %v1179 = vunpack.c.l.b16 %v865
        %v1180 = vunpack.c.l.b16 %v866
        %v1181 = vunpack.c.h.b16 %v866
        %v1182 = vunpack.c.l.b16 %v867
        %v1183 = vunpack.c.h.b16 %v867
        %v1184 = vunpack.c.l.b16 %v868
        %v1185 = vunpack.c.h.b16 %v868
        %v1186 = vunpack.c.l.b16 %v869
        %v1187 = vunpack.c.l.b16 %v870
        %v1188 = vunpack.c.h.b16 %v870
        %v1189 = vunpack.c.l.b16 %v871
        %v1190 = vunpack.c.h.b16 %v871
        %v1191 = vunpack.c.l.b16 %v872
        %v1192 = vunpack.c.h.b16 %v872
        %v1193 = vunpack.c.l.b16 %v873
        %v1194 = vunpack.c.l.b16 %v874
        %v1195 = vunpack.c.h.b16 %v874
        %v1196 = vunpack.c.l.b16 %v875
        %v1197 = vunpack.c.h.b16 %v875
        %v1198 = vunpack.c.l.b16 %v876
        %v1199 = vunpack.c.h.b16 %v876
        %v1200 = vunpack.c.l.b16 %v877
        %v1201 = vunpack.c.l.b16 %v878
        %v1202 = vunpack.c.h.b16 %v878
        %v1203 = vunpack.c.l.b16 %v879
        %v1204 = vunpack.c.h.b16 %v879
        %v1205 = vunpack.c.l.b16 %v880
        %v1206 = vunpack.c.h.b16 %v880
        %v1207 = vunpack.c.l.b16 %v881
        %v1208 = vunpack.c.l.b16 %v882
        %v1209 = vunpack.c.h.b16 %v882
        %v1210 = vunpack.c.l.b16 %v883
        %v1211 = vunpack.c.h.b16 %v883
        %v1212 = vunpack.c.l.b16 %v884
        %v1213 = vunpack.c.h.b16 %v884
        %v1214 = vunpack.c.l.b16 %v885
        %v1215 = vunpack.c.l.b16 %v886
        %v1216 = vunpack.c.h.b16 %v886
        %v1217 = vunpack.c.l.b16 %v887
        %v1218 = vunpack.c.h.b16 %v887
        %v1219 = vunpack.c.l.b16 %v888
        %v1220 = vunpack.c.h.b16 %v888
        %v1221 = vunpack.c.l.b16 %v889
        %v1222 = vunpack.c.l.b16 %v890
        %v1223 = vunpack.c.h.b16 %v890
        %v1224 = vunpack.c.l.b16 %v891
        %v1225 = vunpack.c.h.b16 %v891
        %v1226 = vunpack.c.l.b16 %v892
        %v1227 = vunpack.c.h.b16 %v892
        %v1228 = vunpack.c.l.b16 %v893
        %v1229 = vunpack.c.l.b16 %v894
        %v1230 = vunpack.c.h.b16 %v894
        %v1231 = vunpack.c.l.b16 %v895
        %v1232 = vunpack.c.h.b16 %v895
        %v1233 = vunpack.c.l.b16 %v896
        %v1234 = vunpack.c.h.b16 %v896
        %v1235 = vunpack.c.l.b16 %v897
        %v1236 = vunpack.c.l.b16 %v898
        %v1237 = vunpack.c.h.b16 %v898
        %v1238 = vunpack.c.l.b16 %v899
        %v1239 = vunpack.c.h.b16 %v899
        %v1240 = vunpack.c.l.b16 %v900
        %v1241 = vunpack.c.h.b16 %v900
        %v1242 = vunpack.c.l.b16 %v901
        %v1243 = vunpack.c.l.b16 %v902
        %v1244 = vunpack.c.h.b16 %v902
        %v1245 = vunpack.c.l.b16 %v903
        %v1246 = vunpack.c.h.b16 %v903
        %v1247 = vunpack.c.l.b16 %v904
        %v1248 = vunpack.c.h.b16 %v904
        %v1249 = vunpack.c.l.b16 %v905
        %v1250 = vunpack.c.l.b16 %v906
        %v1251 = vunpack.c.h.b16 %v906
        %v1252 = vunpack.c.l.b16 %v907
        %v1253 = vunpack.c.h.b16 %v907
        %v1254 = vunpack.c.l.b16 %v908
        %v1255 = vunpack.c.h.b16 %v908
        %v1256 = vunpack.c.l.b16 %v909
        %v1257 = vunpack.c.l.b16 %v910
        %v1258 = vunpack.c.h.b16 %v910
        %v1259 = vunpack.c.l.b16 %v911
        %v1260 = vunpack.c.h.b16 %v911
        %v1261 = vunpack.c.l.b16 %v912
        %v1262 = vunpack.c.h.b16 %v912
        %v1263 = vunpack.c.l.b16 %v913
        %v1264 = vunpack.c.l.b16 %v914
        %v1265 = vunpack.c.h.b16 %v914
        %v1266 = vunpack.c.l.b16 %v915
        %v1267 = vunpack.c.h.b16 %v915
        %v1268 = vunpack.c.l.b16 %v916
        %v1269 = vunpack.c.h.b16 %v916
        %v1270 = vunpack.c.l.b16 %v917
        %v1271 = vunpack.c.l.b16 %v918
        %v1272 = vunpack.c.h.b16 %v918
        %v1273 = vunpack.c.l.b16 %v919
        %v1274 = vunpack.c.h.b16 %v919
        %v1275 = vunpack.c.l.b16 %v920
        %v1276 = vunpack.c.h.b16 %v920
        %v1277 = vunpack.c.l.b16 %v921
        %v1278 = vunpack.c.l.b16 %v922
        %v1279 = vunpack.c.h.b16 %v922
        %v1280 = vunpack.c.l.b16 %v923
        %v1281 = vunpack.c.h.b16 %v923
        %v1282 = vunpack.c.l.b16 %v924
        %v1283 = vunpack.c.h.b16 %v924
        %v1284 = vunpack.c.l.b16 %v925
        %v1285 = vunpack.c.l.b16 %v926
        %v1286 = vunpack.c.h.b16 %v926
        %v1287 = vunpack.c.l.b16 %v927
        %v1288 = vunpack.c.h.b16 %v927
        %v1289 = vunpack.c.l.b16 %v928
        %v1290 = vunpack.c.h.b16 %v928
        %v1291 = vunpack.c.l.b16 %v929
        %v1292 = vunpack.c.l.b16 %v930
        %v1293 = vunpack.c.h.b16 %v930
        %v1294 = vunpack.c.l.b16 %v931
        %v1295 = vunpack.c.h.b16 %v931
        %v1296 = vunpack.c.l.b16 %v932
        %v1297 = vunpack.c.h.b16 %v932
        %v1298 = vunpack.c.l.b16 %v933
        %v1299 = vunpack.c.l.b16 %v934
        %v1300 = vunpack.c.h.b16 %v934
        %v1301 = vunpack.c.l.b16 %v935
        %v1302 = vunpack.c.h.b16 %v935
        %v1303 = vunpack.c.l.b16 %v936
        %v1304 = vunpack.c.h.b16 %v936
        %v1305 = vunpack.c.l.b16 %v937
        %v1306 = vunpack.c.l.b16 %v938
        %v1307 = vunpack.c.h.b16 %v938
        %v1308 = vunpack.c.l.b16 %v939
        %v1309 = vunpack.c.h.b16 %v939
        %v1310 = vunpack.c.l.b16 %v940
        %v1311 = vunpack.c.h.b16 %v940
        %v1312 = vunpack.c.l.b16 %v941
        %v1313 = vunpack.c.l.b16 %v942
        %v1314 = vunpack.c.h.b16 %v942
        %v1315 = vunpack.c.l.b16 %v943
        %v1316 = vunpack.c.h.b16 %v943
        %v1317 = vunpack.c.l.b16 %v944
        %v1318 = vunpack.c.h.b16 %v944
        %v1319 = vunpack.c.l.b16 %v945
        %v1320 = vunpack.c.l.b16 %v946
        %v1321 = vunpack.c.h.b16 %v946
        %v1322 = vunpack.c.l.b16 %v947
        %v1323 = vunpack.c.h.b16 %v947
        %v1324 = vunpack.c.l.b16 %v948
        %v1325 = vunpack.c.h.b16 %v948
        %v1326 = vunpack.c.l.b16 %v949
        %v1327 = vunpack.c.l.b16 %v950
        %v1328 = vunpack.c.h.b16 %v950
        %v1329 = vunpack.c.l.b16 %v951
        %v1330 = vunpack.c.h.b16 %v951
        %v1331 = vunpack.c.l.b16 %v952
        %v1332 = vunpack.c.h.b16 %v952
        %v1333 = vunpack.c.l.b16 %v953
        %v1334 = vunpack.c.l.b16 %v954
        %v1335 = vunpack.c.h.b16 %v954
        %v1336 = vunpack.c.l.b16 %v955
        %v1337 = vunpack.c.h.b16 %v955
        %v1338 = vunpack.c.l.b16 %v956
        %v1339 = vunpack.c.h.b16 %v956
        %v1340 = vunpack.c.l.b16 %v957
        %v1341 = vunpack.c.l.b16 %v958
        %v1342 = vunpack.c.h.b16 %v958
        %v1343 = vunpack.c.l.b16 %v959
        %v1344 = vunpack.c.h.b16 %v959
        %v1345 = vunpack.c.l.b16 %v960
        %v1346 = vunpack.c.h.b16 %v960
        %v1347 = vunpack.c.l.b16 %v961
        %v1348 = vunpack.c.l.b16 %v962
        %v1349 = vunpack.c.h.b16 %v962
        %v1350 = vunpack.c.l.b16 %v963
        %v1351 = vunpack.c.h.b16 %v963
        %v1352 = vunpack.c.l.b16 %v964
        %v1353 = vunpack.c.h.b16 %v964
        %v1354 = vunpack.c.l.b16 %v965
        %v1355 = vpack.c.b16 %v1138, %v1131
        %v1356 = vpack.c.b16 %v1139, %v1132
        %v1357 = vpack.c.b16 %v1140, %v1133
        %v1358 = vpack.c.b16 %v1141, %v1134
        %v1359 = vpack.c.b16 %v1142, %v1135
        %v1360 = vpack.c.b16 %v1143, %v1136
        %v1361 = vpack.c.b16 %v1144, %v1137
        %v1362 = vpack.c.b16 %v1152, %v1145
        %v1363 = vpack.c.b16 %v1153, %v1146
        %v1364 = vpack.c.b16 %v1154, %v1147
        %v1365 = vpack.c.b16 %v1155, %v1148
        %v1366 = vpack.c.b16 %v1156, %v1149
        %v1367 = vpack.c.b16 %v1157, %v1150
        %v1368 = vpack.c.b16 %v1158, %v1151
        %v1369 = vpack.c.b16 %v1166, %v1159
        %v1370 = vpack.c.b16 %v1167, %v1160
        %v1371 = vpack.c.b16 %v1168, %v1161
        %v1372 = vpack.c.b16 %v1169, %v1162
        %v1373 = vpack.c.b16 %v1170, %v1163
        %v1374 = vpack.c.b16 %v1171, %v1164
        %v1375 = vpack.c.b16 %v1172, %v1165
        %v1376 = vpack.c.b16 %v1180, %v1173
        %v1377 = vpack.c.b16 %v1181, %v1174
        %v1378 = vpack.c.b16 %v1182, %v1175
        %v1379 = vpack.c.b16 %v1183, %v1176
        %v1380 = vpack.c.b16 %v1184, %v1177
        %v1381 = vpack.c.b16 %v1185, %v1178
        %v1382 = vpack.c.b16 %v1186, %v1179
        %v1383 = vpack.c.b16 %v1194, %v1187
        %v1384 = vpack.c.b16 %v1195, %v1188
        %v1385 = vpack.c.b16 %v1196, %v1189
        %v1386 = vpack.c.b16 %v1197, %v1190
        %v1387 = vpack.c.b16 %v1198, %v1191
        %v1388 = vpack.c.b16 %v1199, %v1192
        %v1389 = vpack.c.b16 %v1200, %v1193
        %v1390 = vpack.c.b16 %v1208, %v1201
        %v1391 = vpack.c.b16 %v1209, %v1202
        %v1392 = vpack.c.b16 %v1210, %v1203
        %v1393 = vpack.c.b16 %v1211, %v1204
        %v1394 = vpack.c.b16 %v1212, %v1205
        %v1395 = vpack.c.b16 %v1213, %v1206
        %v1396 = vpack.c.b16 %v1214, %v1207
        %v1397 = vpack.c.b16 %v1222, %v1215
        %v1398 = vpack.c.b16 %v1223, %v1216
        %v1399 = vpack.c.b16 %v1224, %v1217
        %v1400 = vpack.c.b16 %v1225, %v1218
        %v1401 = vpack.c.b16 %v1226, %v1219
        %v1402 = vpack.c.b16 %v1227, %v1220
        %v1403 = vpack.c.b16 %v1228, %v1221
        %v1404 = vpack.c.b16 %v1236, %v1229
        %v1405 = vpack.c.b16 %v1237, %v1230
        %v1406 = vpack.c.b16 %v1238, %v1231
        %v1407 = vpack.c.b16 %v1239, %v1232
        %v1408 = vpack.c.b16 %v1240, %v1233
        %v1409 = vpack.c.b16 %v1241, %v1234
        %v1410 = vpack.c.b16 %v1242, %v1235
        %v1411 = vpack.c.b16 %v1250, %v1243
        %v1412 = vpack.c.b16 %v1251, %v1244
        %v1413 = vpack.c.b16 %v1252, %v1245
        %v1414 = vpack.c.b16 %v1253, %v1246
        %v1415 = vpack.c.b16 %v1254, %v1247
        %v1416 = vpack.c.b16 %v1255, %v1248
        %v1417 = vpack.c.b16 %v1256, %v1249
        %v1418 = vpack.c.b16 %v1264, %v1257
        %v1419 = vpack.c.b16 %v1265, %v1258
        %v1420 = vpack.c.b16 %v1266, %v1259
        %v1421 = vpack.c.b16 %v1267, %v1260
        %v1422 = vpack.c.b16 %v1268, %v1261
        %v1423 = vpack.c.b16 %v1269, %v1262
        %v1424 = vpack.c.b16 %v1270, %v1263
        %v1425 = vpack.c.b16 %v1278, %v1271
        %v1426 = vpack.c.b16 %v1279, %v1272
        %v1427 = vpack.c.b16 %v1280, %v1273
        %v1428 = vpack.c.b16 %v1281, %v1274
        %v1429 = vpack.c.b16 %v1282, %v1275
        %v1430 = vpack.c.b16 %v1283, %v1276
        %v1431 = vpack.c.b16 %v1284, %v1277
        %v1432 = vpack.c.b16 %v1292, %v1285
        %v1433 = vpack.c.b16 %v1293, %v1286
        %v1434 = vpack.c.b16 %v1294, %v1287
        %v1435 = vpack.c.b16 %v1295, %v1288
        %v1436 = vpack.c.b16 %v1296, %v1289
        %v1437 = vpack.c.b16 %v1297, %v1290
        %v1438 = vpack.c.b16 %v1298, %v1291
        %v1439 = vpack.c.b16 %v1306, %v1299
        %v1440 = vpack.c.b16 %v1307, %v1300
        %v1441 = vpack.c.b16 %v1308, %v1301
        %v1442 = vpack.c.b16 %v1309, %v1302
        %v1443 = vpack.c.b16 %v1310, %v1303
        %v1444 = vpack.c.b16 %v1311, %v1304
        %v1445 = vpack.c.b16 %v1312, %v1305
        %v1446 = vpack.c.b16 %v1320, %v1313
        %v1447 = vpack.c.b16 %v1321, %v1314
        %v1448 = vpack.c.b16 %v1322, %v1315
        %v1449 = vpack.c.b16 %v1323, %v1316
        %v1450 = vpack.c.b16 %v1324, %v1317
        %v1451 = vpack.c.b16 %v1325, %v1318
        %v1452 = vpack.c.b16 %v1326, %v1319
        %v1453 = vpack.c.b16 %v1334, %v1327
        %v1454 = vpack.c.b16 %v1335, %v1328
        %v1455 = vpack.c.b16 %v1336, %v1329
        %v1456 = vpack.c.b16 %v1337, %v1330
        %v1457 = vpack.c.b16 %v1338, %v1331
        %v1458 = vpack.c.b16 %v1339, %v1332
        %v1459 = vpack.c.b16 %v1340, %v1333
        %v1460 = vpack.c.b16 %v1348, %v1341
        %v1461 = vpack.c.b16 %v1349, %v1342
        %v1462 = vpack.c.b16 %v1350, %v1343
        %v1463 = vpack.c.b16 %v1351, %v1344
        %v1464 = vpack.c.b16 %v1352, %v1345
        %v1465 = vpack.c.b16 %v1353, %v1346
        %v1466 = vpack.c.b16 %v1354, %v1347
        %1579 = vmatprep.subr.bf16.mxu0 %v1356
        %1580 = vmatpush1.bf16.msra.mxu0 %v1355
        %1581 = vmatprep.subr.bf16.mxu0 %v1363
        %1582 = vmatpush1.bf16.msra.mxu0 %v1362
        %1583 = vmatprep.subr.bf16.mxu0 %v1370
        %1584 = vmatpush1.bf16.msra.mxu0 %v1369
        %1585 = vmatprep.subr.bf16.mxu0 %v1377
        %1586 = vmatpush1.bf16.msra.mxu0 %v1376
        %1587 = vmatprep.subr.bf16.mxu0 %v1384
        %1588 = vmatpush1.bf16.msra.mxu0 %v1383
        %1589 = vmatprep.subr.bf16.mxu0 %v1391
        %1590 = vmatpush1.bf16.msra.mxu0 %v1390
        %1591 = vmatprep.subr.bf16.mxu0 %v1398
        %1592 = vmatpush1.bf16.msra.mxu0 %v1397
        %1593 = vmatprep.subr.bf16.mxu0 %v1405
        %1594 = vmatpush1.bf16.msra.mxu0 %v1404
        %1595 = vmatprep.subr.bf16.mxu0 %v1412
        %1596 = vmatpush1.bf16.msra.mxu0 %v1411
        %1597 = vmatprep.subr.bf16.mxu0 %v1419
        %1598 = vmatpush1.bf16.msra.mxu0 %v1418
        %1599 = vmatprep.subr.bf16.mxu0 %v1426
        %1600 = vmatpush1.bf16.msra.mxu0 %v1425
        %1601 = vmatprep.subr.bf16.mxu0 %v1433
        %1602 = vmatpush1.bf16.msra.mxu0 %v1432
        %1603 = vmatprep.subr.bf16.mxu0 %v1440
        %1604 = vmatpush1.bf16.msra.mxu0 %v1439
        %1605 = vmatprep.subr.bf16.mxu0 %v1447
        %1606 = vmatpush1.bf16.msra.mxu0 %v1446
        %1607 = vmatprep.subr.bf16.mxu0 %v1454
        %1608 = vmatpush1.bf16.msra.mxu0 %v1453
        %1609 = vmatprep.subr.bf16.mxu0 %v1461
        %1610 = vmatpush1.bf16.msra.mxu0 %v1460
        %1611 = vmatprep.mubr.bf16.mxu0 %v837
        %1612 = vmatmul.mubr.bf16.gmra.mrb[0].mxu0 %v836
        %v1613 = vpop.f32.mrb[0].mxu0
        %v1614 = vadd.f32 %v971, %v1613
        %v1615 = vpop.f32.mrb[0].mxu0
        %v1616 = vadd.f32 %v975, %v1615
        %v1617 = vpop.f32.mrb[0].mxu0
        %v1618 = vadd.f32 %v971, %v1617
        %v1619 = vpop.f32.mrb[0].mxu0
        %v1620 = vadd.f32 %v975, %v1619
        %1621 = vdwg.mxu0
        %1622 = vmatprep.subr.bf16.mxu0 %v1358
        %1623 = vmatpush1.bf16.msra.mxu0 %v1357
        %1624 = vmatprep.subr.bf16.mxu0 %v1365
        %1625 = vmatpush1.bf16.msra.mxu0 %v1364
        %1626 = vmatprep.subr.bf16.mxu0 %v1372
        %1627 = vmatpush1.bf16.msra.mxu0 %v1371
        %1628 = vmatprep.subr.bf16.mxu0 %v1379
        %1629 = vmatpush1.bf16.msra.mxu0 %v1378
        %1630 = vmatprep.subr.bf16.mxu0 %v1386
        %1631 = vmatpush1.bf16.msra.mxu0 %v1385
        %1632 = vmatprep.subr.bf16.mxu0 %v1393
        %1633 = vmatpush1.bf16.msra.mxu0 %v1392
        %1634 = vmatprep.subr.bf16.mxu0 %v1400
        %1635 = vmatpush1.bf16.msra.mxu0 %v1399
        %1636 = vmatprep.subr.bf16.mxu0 %v1407
        %1637 = vmatpush1.bf16.msra.mxu0 %v1406
        %1638 = vmatprep.subr.bf16.mxu0 %v1414
        %1639 = vmatpush1.bf16.msra.mxu0 %v1413
        %1640 = vmatprep.subr.bf16.mxu0 %v1421
        %1641 = vmatpush1.bf16.msra.mxu0 %v1420
        %1642 = vmatprep.subr.bf16.mxu0 %v1428
        %1643 = vmatpush1.bf16.msra.mxu0 %v1427
        %1644 = vmatprep.subr.bf16.mxu0 %v1435
        %1645 = vmatpush1.bf16.msra.mxu0 %v1434
        %1646 = vmatprep.subr.bf16.mxu0 %v1442
        %1647 = vmatpush1.bf16.msra.mxu0 %v1441
        %1648 = vmatprep.subr.bf16.mxu0 %v1449
        %1649 = vmatpush1.bf16.msra.mxu0 %v1448
        %1650 = vmatprep.subr.bf16.mxu0 %v1456
        %1651 = vmatpush1.bf16.msra.mxu0 %v1455
        %1652 = vmatprep.subr.bf16.mxu0 %v1463
        %1653 = vmatpush1.bf16.msra.mxu0 %v1462
        %1654 = vmatprep.mubr.bf16.mxu0 %v837
        %1655 = vmatmul.mubr.bf16.gmra.mrb[0].mxu0 %v836
        %v1656 = vpop.f32.mrb[0].mxu0
        %v1657 = vadd.f32 %v979, %v1656
        %v1658 = vpop.f32.mrb[0].mxu0
        %v1659 = vadd.f32 %v983, %v1658
        %v1660 = vpop.f32.mrb[0].mxu0
        %v1661 = vadd.f32 %v979, %v1660
        %v1662 = vpop.f32.mrb[0].mxu0
        %v1663 = vadd.f32 %v983, %v1662
        %1664 = vdwg.mxu0
        %1665 = vmatprep.subr.bf16.mxu0 %v1360
        %1666 = vmatpush1.bf16.msra.mxu0 %v1359
        %1667 = vmatprep.subr.bf16.mxu0 %v1367
        %1668 = vmatpush1.bf16.msra.mxu0 %v1366
        %1669 = vmatprep.subr.bf16.mxu0 %v1374
        %1670 = vmatpush1.bf16.msra.mxu0 %v1373
        %1671 = vmatprep.subr.bf16.mxu0 %v1381
        %1672 = vmatpush1.bf16.msra.mxu0 %v1380
        %1673 = vmatprep.subr.bf16.mxu0 %v1388
        %1674 = vmatpush1.bf16.msra.mxu0 %v1387
        %1675 = vmatprep.subr.bf16.mxu0 %v1395
        %1676 = vmatpush1.bf16.msra.mxu0 %v1394
        %1677 = vmatprep.subr.bf16.mxu0 %v1402
        %1678 = vmatpush1.bf16.msra.mxu0 %v1401
        %1679 = vmatprep.subr.bf16.mxu0 %v1409
        %1680 = vmatpush1.bf16.msra.mxu0 %v1408
        %1681 = vmatprep.subr.bf16.mxu0 %v1416
        %1682 = vmatpush1.bf16.msra.mxu0 %v1415
        %1683 = vmatprep.subr.bf16.mxu0 %v1423
        %1684 = vmatpush1.bf16.msra.mxu0 %v1422
        %1685 = vmatprep.subr.bf16.mxu0 %v1430
        %1686 = vmatpush1.bf16.msra.mxu0 %v1429
        %1687 = vmatprep.subr.bf16.mxu0 %v1437
        %1688 = vmatpush1.bf16.msra.mxu0 %v1436
        %1689 = vmatprep.subr.bf16.mxu0 %v1444
        %1690 = vmatpush1.bf16.msra.mxu0 %v1443
        %1691 = vmatprep.subr.bf16.mxu0 %v1451
        %1692 = vmatpush1.bf16.msra.mxu0 %v1450
        %1693 = vmatprep.subr.bf16.mxu0 %v1458
        %1694 = vmatpush1.bf16.msra.mxu0 %v1457
        %1695 = vmatprep.subr.bf16.mxu0 %v1465
        %1696 = vmatpush1.bf16.msra.mxu0 %v1464
        %1697 = vmatprep.mubr.bf16.mxu0 %v837
        %1698 = vmatmul.mubr.bf16.gmra.mrb[0].mxu0 %v836
        %v1699 = vpop.f32.mrb[0].mxu0
        %v1700 = vadd.f32 %v987, %v1699
        %v1701 = vpop.f32.mrb[0].mxu0
        %v1702 = vadd.f32 %v991, %v1701
        %v1703 = vpop.f32.mrb[0].mxu0
        %v1704 = vadd.f32 %v987, %v1703
        %v1705 = vpop.f32.mrb[0].mxu0
        %v1706 = vadd.f32 %v991, %v1705
        %1707 = vdwg.mxu0
        %1708 = vmatprep.subr.bf16.mxu0 0
        %1709 = vmatpush1.bf16.msra.mxu0 %v1361
        %1710 = vmatprep.subr.bf16.mxu0 0
        %1711 = vmatpush1.bf16.msra.mxu0 %v1368
        %1712 = vmatprep.subr.bf16.mxu0 0
        %1713 = vmatpush1.bf16.msra.mxu0 %v1375
        %1714 = vmatprep.subr.bf16.mxu0 0
        %1715 = vmatpush1.bf16.msra.mxu0 %v1382
        %1716 = vmatprep.subr.bf16.mxu0 0
        %1717 = vmatpush1.bf16.msra.mxu0 %v1389
        %1718 = vmatprep.subr.bf16.mxu0 0
        %1719 = vmatpush1.bf16.msra.mxu0 %v1396
        %1720 = vmatprep.subr.bf16.mxu0 0
        %1721 = vmatpush1.bf16.msra.mxu0 %v1403
        %1722 = vmatprep.subr.bf16.mxu0 0
        %1723 = vmatpush1.bf16.msra.mxu0 %v1410
        %1724 = vmatprep.subr.bf16.mxu0 0
        %1725 = vmatpush1.bf16.msra.mxu0 %v1417
        %1726 = vmatprep.subr.bf16.mxu0 0
        %1727 = vmatpush1.bf16.msra.mxu0 %v1424
        %1728 = vmatprep.subr.bf16.mxu0 0
        %1729 = vmatpush1.bf16.msra.mxu0 %v1431
        %1730 = vmatprep.subr.bf16.mxu0 0
        %1731 = vmatpush1.bf16.msra.mxu0 %v1438
        %1732 = vmatprep.subr.bf16.mxu0 0
        %1733 = vmatpush1.bf16.msra.mxu0 %v1445
        %1734 = vmatprep.subr.bf16.mxu0 0
        %1735 = vmatpush1.bf16.msra.mxu0 %v1452
        %1736 = vmatprep.subr.bf16.mxu0 0
        %1737 = vmatpush1.bf16.msra.mxu0 %v1459
        %1738 = vmatprep.subr.bf16.mxu0 0
        %1739 = vmatpush1.bf16.msra.mxu0 %v1466
        %1740 = vmatprep.mubr.bf16.mxu0 %v837
        %1741 = vmatmul.mubr.bf16.gmra.mrb[0].mxu0 %v836
        %v1742 = vpop.f32.mrb[0].mxu0
        %v1743 = vadd.f32 %v995, %v1742
        %v1744 = vpop.f32.mrb[0].mxu0
        %v1745 = vpop.f32.mrb[0].mxu0
        %v1746 = vadd.f32 %v995, %v1745
        %v1747 = vpop.f32.mrb[0].mxu0
        %1748 = vdwg.mxu0
        %v1749 = vtanh.pop %v1614
        %v1750 = vtanh.pop %v1616
        %v1751 = vtanh.pop %v1657
        %v1752 = vtanh.pop %v1659
        %v1753 = vtanh.pop %v1700
        %v1754 = vtanh.pop %v1702
        %v1755 = vtanh.pop %v1743
        %v1756 = vtanh.pop %v1618
        %v1757 = vtanh.pop %v1620
        %v1758 = vtanh.pop %v1661
        %v1759 = vtanh.pop %v1663
        %v1760 = vtanh.pop %v1704
        %v1761 = vtanh.pop %v1706
        %v1762 = vtanh.pop %v1746
        %v1763 = vpack.c.bf16 %v1756, %v1749
        %v1764 = vpack.c.bf16 %v1757, %v1750
        %v1765 = vpack.c.bf16 %v1758, %v1751
        %v1766 = vpack.c.bf16 %v1759, %v1752
        %v1767 = vpack.c.bf16 %v1760, %v1753
        %v1768 = vpack.c.bf16 %v1761, %v1754
        %v1769 = vpack.c.bf16 %v1762, %v1755
        %v1777 = vunpack.c.l.b16 %v1763
        %v1778 = vunpack.c.l.b16 %v1764
        %v1779 = vunpack.c.l.b16 %v1765
        %v1780 = vunpack.c.l.b16 %v1766
        %v1781 = vunpack.c.l.b16 %v1767
        %v1782 = vunpack.c.l.b16 %v1768
        %v1783 = vunpack.c.l.b16 %v1769
        %v1784 = vunpack.c.h.b16 %v1763
        %v1785 = vunpack.c.h.b16 %v1764
        %v1786 = vunpack.c.h.b16 %v1765
        %v1787 = vunpack.c.h.b16 %v1766
        %v1788 = vunpack.c.h.b16 %v1767
        %v1789 = vunpack.c.h.b16 %v1768
        %v1790 = vunpack.c.h.b16 %v1769
        %v1791 = vpack.c.b16 %v1778, %v1777
        %v1792 = vpack.c.b16 %v1780, %v1779
        %v1793 = vpack.c.b16 %v1782, %v1781
        %v1794 = vpack.c.b16 %v1783, %v1783
        %v1795 = vpack.c.b16 %v1785, %v1784
        %v1796 = vpack.c.b16 %v1787, %v1786
        %v1797 = vpack.c.b16 %v1789, %v1788
        %v1798 = vpack.c.b16 %v1790, %v1790
        %1807 = vst [vmem:[%s399] sm:$0xff] %v1791
        %1808 = vst [vmem:[%s399 + $0x8] sm:$0xff] %v1792
        %1809 = vst [vmem:[%s399 + $0x10] sm:$0xff] %v1793
        %1810 = vst [vmem:[%s399 + $0x18] sm:$0xf] %v1794
        %1811 = vst [vmem:[%s399 + $0x1c] sm:$0xff] %v1795
        %1812 = vst [vmem:[%s399 + $0x24] sm:$0xff] %v1796
        %1813 = vst [vmem:[%s399 + $0x2c] sm:$0xff] %v1797
        %1814 = vst [vmem:[%s399 + $0x34] sm:$0xf] %v1798
        %s1815 = sand.u32 %s233, 1
        %s1816 = scalar_lea.sflag [#allocation4], %s1815
        %s1817 = sand.u32 %s233, 1
        %s1818 = smul.addr %s1817, 56
        %s1819 = scalar_lea.vmem [#allocation10], %s1818
        // Predicated region
        $region73: #{tpu_custom_call.1} parent=55 // pred_check
          %p1820 = pneg %p243
        $region74: #{tpu_custom_call.1} parent=55 // pred_check_branch
          %1822 = sbr.rel (%p1820) target = $region76
        $region75: #{tpu_custom_call.1} parent=55 // pred_region
          %s1823 = smul.u32 2, %s26
          %s1825 = ssub.s32 896, 896
          %1826 = vsyncadd %s1816, %s1825
          %s1827 = smul.addr %s1823, 7
          %s1828 = smul.addr %s1827, 64
          %s1829 = scalar_lea.hbm %s9, %s1828
          %s1830 = sshll.u32 %s1819, 4
          %s1831 = int_to_ptr.vmem [resolvable:$true] %s1830
          %1836 = dma.vmem_to_hbm [thread:$0]  %s1831, 896, %s1829, %s1816, 448, 448, 28
        $region76: #{tpu_custom_call.1} parent=55 // pred_fallthru
          _
      $region56: #{tpu_custom_call.1} parent=5 // pred_fallthru
        _
      %p1837 = scmp.le.s32.totalorder 2, %s21
      // Predicated region
      $region77: #{tpu_custom_call.1} parent=5 // pred_check
        %p1838 = pneg %p1837
      $region78: #{tpu_custom_call.1} parent=5 // pred_check_branch
        %1840 = sbr.rel (%p1838) target = $region80
      $region79: #{tpu_custom_call.1} parent=5 // pred_region
        %s1841 = ssub.s32 %s21, 2
        // Predicated region
        $region81: #{tpu_custom_call.1} parent=79 // pred_check
          %p1842 = pneg %p249
        $region82: #{tpu_custom_call.1} parent=79 // pred_check_branch
          %1844 = sbr.rel (%p1842) target = $region84
        $region83: #{tpu_custom_call.1} parent=79 // pred_region
          %s1845 = sand.u32 %s234, 1
          %s1846 = scalar_lea.sflag [#allocation4], %s1845
          %s1847 = sand.u32 %s234, 1
          %s1848 = smul.addr %s1847, 56
          %s1849 = scalar_lea.vmem [#allocation10], %s1848
          %1850 = dma.done %s1846, 896
        $region84: #{tpu_custom_call.1} parent=79 // pred_fallthru
          _
      $region80: #{tpu_custom_call.1} parent=5 // pred_fallthru
        _
    $region6: #{tpu_custom_call.1} parent=1 // loop_footer
      %s25 = sadd.s32 1, %s21
    $region7: #{tpu_custom_call.1} parent=1 // loop_footer_branch
      %20 = sbr.rel target = $region3
    $region8: #{tpu_custom_call.1} parent=1 // loop_exit
      _
    %1851 = vsyncpa [#allocation3], 1
    %s1852 = scalar_lea.sflag [#allocation3], 1
    %1853 = vsyncpa %s1852, 1
    %1854 = vsyncpa [#allocation6], 1
    %1855 = vsyncpa [#allocation9], 1
    %1856 = vsyncpa [#allocation4], 1
    %s1857 = scalar_lea.sflag [#allocation4], 1
    %1858 = vsyncpa %s1857, 1

</llo_original>
